<compile_context>
chip_gen: v7x
topology: tpu7x:2x2x1
jax: 0.10.0
libtpu: 0.0.40
codegen_flags: <defaults>
</compile_context>

<pallas_src>
import math

import jax
import jax.numpy as jnp
from jax.experimental import pallas as pl
from jax.experimental.pallas import tpu as pltpu


IN_DIM = 28 * 28   # 784
H1_DIM = 300
H2_DIM = 100
OUT_DIM = 10
H2_PAD = 128       # lane-padded hidden-2 width
OUT_PAD = 128      # lane-padded output width


def _round_up(x, m):
    return ((x + m - 1) // m) * m


def lenet_kernel(x_ref, w1_ref, b1_ref, w2_ref, b2_ref, w3_ref, b3_ref, o_ref):
    # Three MXU matmuls (bf16 inputs, f32 accumulation) + f32 VPU bias/ReLU.
    x = x_ref[...].astype(jnp.bfloat16)                                  # f32 read, in-kernel cast
    h1 = jnp.dot(x, w1_ref[...], preferred_element_type=jnp.float32)     # (TB, 300) f32
    h1 = jnp.maximum(h1 + b1_ref[...], 0.0)                              # f32 ReLU
    h2 = jnp.dot(h1.astype(jnp.bfloat16), w2_ref[...],
                 preferred_element_type=jnp.float32)                     # (TB, 128) f32
    h2 = jnp.maximum(h2 + b2_ref[...], 0.0)                              # f32 ReLU (pad cols stay 0)
    out = jnp.dot(h2.astype(jnp.bfloat16), w3_ref[...],
                  preferred_element_type=jnp.float32)                    # (TB, 128) f32
    o_ref[...] = (out + b3_ref[...]).astype(o_ref.dtype)                 # bf16 lane-dense store


def _pick_tile(B, tb):
    """Batch tile: multiple of 16 (bf16 sublane pack), capped so the batch gives
    at least 2 grid steps when possible (v7x 2-TC sharding), and never larger than B."""
    TB = min(_round_up(tb, 16), _round_up(B, 16))
    if B > 32:
        TB = min(TB, _round_up(pl.cdiv(B, 2), 16))
    return max(16, (TB // 16) * 16)


def lenet_300_100_forward(x_nchw, params, *, tb=2048):
    """x_nchw: (B, 1, 28, 28) float32.  params: dict of f32 weights/biases stored as
    (in, out) so y = x @ W + b matches nn.Linear. Returns (B, 10) float32."""
    B = x_nchw.shape[0]
    x = x_nchw.reshape(B, IN_DIM)                  # same semantics as torch .view(B, 784); stays f32

    TB = _pick_tile(B, tb)
    grid = (pl.cdiv(B, TB),)                       # partial last block handled by Pallas

    # Weights: bf16 for the MXU (VMEM-resident across grid steps via constant index maps).
    # Layer-2 output / layer-3 padded to 128 lanes with zeros -> math for the first 10
    # output columns is exact and the final matmul + store are lane-dense.
    w1 = params["w1"].astype(jnp.bfloat16)                                            # (784, 300)
    b1 = params["b1"]                                                                 # (1, 300) f32
    w2 = jnp.pad(params["w2"], ((0, 0), (0, H2_PAD - H2_DIM))).astype(jnp.bfloat16)   # (300, 128)
    b2 = jnp.pad(params["b2"], ((0, 0), (0, H2_PAD - H2_DIM)))                        # (1, 128) f32
    w3 = jnp.pad(params["w3"], ((0, H2_PAD - H2_DIM), (0, OUT_PAD - OUT_DIM))
                 ).astype(jnp.bfloat16)                                               # (128, 128)
    b3 = jnp.pad(params["b3"], ((0, 0), (0, OUT_PAD - OUT_DIM)))                      # (1, 128) f32

    const = lambda shape: pl.BlockSpec(shape, lambda i: (0, 0))   # VMEM-resident across steps

    out_padded = pl.pallas_call(
        lenet_kernel,
        out_shape=jax.ShapeDtypeStruct((B, OUT_PAD), jnp.bfloat16),   # bf16 writeback
        grid=grid,
        in_specs=[
            pl.BlockSpec((TB, IN_DIM), lambda i: (i, 0)),   # x: f32, tiled over batch
            const(w1.shape), const(b1.shape),
            const(w2.shape), const(b2.shape),
            const(w3.shape), const(b3.shape),
        ],
        out_specs=pl.BlockSpec((TB, OUT_PAD), lambda i: (i, 0)),
        compiler_params=pltpu.CompilerParams(
            dimension_semantics=("parallel",),              # v7x: shard batch tiles on 2 TCs
            vmem_limit_bytes=48 * 1024 * 1024,              # > v5e 16 MiB default, < v7x 64 MiB/TC
        ),
    )(x, w1, b1, w2, b2, w3, b3)

    return out_padded[:, :OUT_DIM].astype(jnp.float32)


def init_params(key):
    """Deterministic init matching PyTorch nn.Linear default (uniform +/- 1/sqrt(fan_in))."""
    def linear(key, fan_in, fan_out):
        kw, kb = jax.random.split(key)
        bound = 1.0 / math.sqrt(fan_in)
        w = jax.random.uniform(kw, (fan_in, fan_out), jnp.float32, -bound, bound)
        b = jax.random.uniform(kb, (1, fan_out), jnp.float32, -bound, bound)
        return w, b

    k1, k2, k3 = jax.random.split(key, 3)
    w1, b1 = linear(k1, IN_DIM, H1_DIM)
    w2, b2 = linear(k2, H1_DIM, H2_DIM)
    w3, b3 = linear(k3, H2_DIM, OUT_DIM)
    return {"w1": w1, "b1": b1, "w2": w2, "b2": b2, "w3": w3, "b3": b3}


def reference_forward(x_nchw, p):
    x = x_nchw.reshape(x_nchw.shape[0], IN_DIM)
    h1 = jnp.maximum(x @ p["w1"] + p["b1"], 0.0)
    h2 = jnp.maximum(h1 @ p["w2"] + p["b2"], 0.0)
    return h2 @ p["w3"] + p["b3"]


if __name__ == "__main__":
    key = jax.random.PRNGKey(0)
    k_params, k_x = jax.random.split(key)

    params = init_params(k_params)
    # Small batch, MNIST-shaped NCHW input as the module's forward implies.
    x = jax.random.normal(k_x, (2, 1, 28, 28), jnp.float32)

    out = lenet_300_100_forward(x, params)
    out = jax.block_until_ready(out)

    ref = reference_forward(x, params)
    assert out.shape == (2, 10)
    # bf16 matmul inputs + bf16 writeback (f32 accumulation) -> loosened tolerance vs f32 ref.
    assert jnp.allclose(out, ref, atol=5e-2, rtol=5e-2), (out, ref)

    print("KERNEL_OK")
</pallas_src>

<mosaic_0001>
module attributes {stable_mosaic.version = 11 : i64} {
  func.func @lenet_kernel(%arg0: i32, %arg1: memref<16x784xf32, #tpu.memory_space<vmem>>, %arg2: memref<784x300xbf16, #tpu.memory_space<vmem>>, %arg3: memref<1x300xf32, #tpu.memory_space<vmem>>, %arg4: memref<300x128xbf16, #tpu.memory_space<vmem>>, %arg5: memref<1x128xf32, #tpu.memory_space<vmem>>, %arg6: memref<128x128xbf16, #tpu.memory_space<vmem>>, %arg7: memref<1x128xf32, #tpu.memory_space<vmem>>, %arg8: memref<16x128xbf16, #tpu.memory_space<vmem>>) attributes {dimension_semantics = [#tpu.dimension_semantics<parallel>], iteration_bounds = array<i64: 1>, scalar_prefetch = 0 : i64, scratch_operands = 0 : i64, tpu.core_type = #tpu.core_type<tc>, window_params = [{transform_indices = @transform_0, window_bounds = array<i64: 16, 784>}, {pipeline_mode = #tpu.pipeline_mode<synchronous>, transform_indices = @transform_1, window_bounds = array<i64: 784, 300>}, {pipeline_mode = #tpu.pipeline_mode<synchronous>, transform_indices = @transform_2, window_bounds = array<i64: 1, 300>}, {pipeline_mode = #tpu.pipeline_mode<synchronous>, transform_indices = @transform_3, window_bounds = array<i64: 300, 128>}, {pipeline_mode = #tpu.pipeline_mode<synchronous>, transform_indices = @transform_4, window_bounds = array<i64: 1, 128>}, {pipeline_mode = #tpu.pipeline_mode<synchronous>, transform_indices = @transform_5, window_bounds = array<i64: 128, 128>}, {pipeline_mode = #tpu.pipeline_mode<synchronous>, transform_indices = @transform_6, window_bounds = array<i64: 1, 128>}, {transform_indices = @transform_7, window_bounds = array<i64: 16, 128>}]} {
    %c0 = arith.constant 0 : index
    %c0_0 = arith.constant 0 : index
    %0 = vector.load %arg1[%c0, %c0_0] : memref<16x784xf32, #tpu.memory_space<vmem>>, vector<16x784xf32>
    %1 = arith.truncf %0 : vector<16x784xf32> to vector<16x784xbf16>
    %c0_1 = arith.constant 0 : index
    %c0_2 = arith.constant 0 : index
    %2 = vector.load %arg2[%c0_1, %c0_2] : memref<784x300xbf16, #tpu.memory_space<vmem>>, vector<784x300xbf16>
    %cst = arith.constant dense<0.000000e+00> : vector<16x300xf32>
    %3 = tpu.matmul %1, %2, %cst {dimension_numbers = #tpu.dot_dimension_numbers<[1], [0], [0], [1], [0, 0, 1, 1], [], []>} : vector<16x784xbf16>, vector<784x300xbf16>, vector<16x300xf32> -> vector<16x300xf32>
    %c0_3 = arith.constant 0 : index
    %c0_4 = arith.constant 0 : index
    %4 = vector.load %arg3[%c0_3, %c0_4] : memref<1x300xf32, #tpu.memory_space<vmem>>, vector<1x300xf32>
    %5 = vector.broadcast %4 : vector<1x300xf32> to vector<16x300xf32>
    %6 = arith.addf %3, %5 : vector<16x300xf32>
    %cst_5 = arith.constant 0.000000e+00 : f32
    %7 = vector.broadcast %cst_5 : f32 to vector<16x300xf32>
    %8 = arith.maximumf %6, %7 : vector<16x300xf32>
    %9 = arith.truncf %8 : vector<16x300xf32> to vector<16x300xbf16>
    %c0_6 = arith.constant 0 : index
    %c0_7 = arith.constant 0 : index
    %10 = vector.load %arg4[%c0_6, %c0_7] : memref<300x128xbf16, #tpu.memory_space<vmem>>, vector<300x128xbf16>
    %cst_8 = arith.constant dense<0.000000e+00> : vector<16x128xf32>
    %11 = tpu.matmul %9, %10, %cst_8 {dimension_numbers = #tpu.dot_dimension_numbers<[1], [0], [0], [1], [0, 0, 1, 1], [], []>} : vector<16x300xbf16>, vector<300x128xbf16>, vector<16x128xf32> -> vector<16x128xf32>
    %c0_9 = arith.constant 0 : index
    %c0_10 = arith.constant 0 : index
    %12 = vector.load %arg5[%c0_9, %c0_10] : memref<1x128xf32, #tpu.memory_space<vmem>>, vector<1x128xf32>
    %13 = vector.broadcast %12 : vector<1x128xf32> to vector<16x128xf32>
    %14 = arith.addf %11, %13 : vector<16x128xf32>
    %cst_11 = arith.constant 0.000000e+00 : f32
    %15 = vector.broadcast %cst_11 : f32 to vector<16x128xf32>
    %16 = arith.maximumf %14, %15 : vector<16x128xf32>
    %17 = arith.truncf %16 : vector<16x128xf32> to vector<16x128xbf16>
    %c0_12 = arith.constant 0 : index
    %c0_13 = arith.constant 0 : index
    %18 = vector.load %arg6[%c0_12, %c0_13] : memref<128x128xbf16, #tpu.memory_space<vmem>>, vector<128x128xbf16>
    %cst_14 = arith.constant dense<0.000000e+00> : vector<16x128xf32>
    %19 = tpu.matmul %17, %18, %cst_14 {dimension_numbers = #tpu.dot_dimension_numbers<[1], [0], [0], [1], [0, 0, 1, 1], [], []>} : vector<16x128xbf16>, vector<128x128xbf16>, vector<16x128xf32> -> vector<16x128xf32>
    %c0_15 = arith.constant 0 : index
    %c0_16 = arith.constant 0 : index
    %20 = vector.load %arg7[%c0_15, %c0_16] : memref<1x128xf32, #tpu.memory_space<vmem>>, vector<1x128xf32>
    %21 = vector.broadcast %20 : vector<1x128xf32> to vector<16x128xf32>
    %22 = arith.addf %19, %21 : vector<16x128xf32>
    %23 = arith.truncf %22 : vector<16x128xf32> to vector<16x128xbf16>
    %c0_17 = arith.constant 0 : index
    %c0_18 = arith.constant 0 : index
    %24 = vector.load %arg8[%c0_17, %c0_18] : memref<16x128xbf16, #tpu.memory_space<vmem>>, vector<16x128xbf16>
    tpu.vector_store %arg8[%c0_17, %c0_18], %23 {strides = array<i32>} : memref<16x128xbf16, #tpu.memory_space<vmem>>, vector<16x128xbf16>,
    return
  }
  func.func @transform_0(%arg0: i32) -> (i32, i32) {
    %c0_i32 = arith.constant 0 : i32
    %c0_i32_0 = arith.constant 0 : i32
    return %arg0, %c0_i32 : i32, i32
  }
  func.func @transform_1(%arg0: i32) -> (i32, i32) {
    %c0_i32 = arith.constant 0 : i32
    %c0_i32_0 = arith.constant 0 : i32
    %c0_i32_1 = arith.constant 0 : i32
    return %c0_i32, %c0_i32_0 : i32, i32
  }
  func.func @transform_2(%arg0: i32) -> (i32, i32) {
    %c0_i32 = arith.constant 0 : i32
    %c0_i32_0 = arith.constant 0 : i32
    %c0_i32_1 = arith.constant 0 : i32
    return %c0_i32, %c0_i32_0 : i32, i32
  }
  func.func @transform_3(%arg0: i32) -> (i32, i32) {
    %c0_i32 = arith.constant 0 : i32
    %c0_i32_0 = arith.constant 0 : i32
    %c0_i32_1 = arith.constant 0 : i32
    return %c0_i32, %c0_i32_0 : i32, i32
  }
  func.func @transform_4(%arg0: i32) -> (i32, i32) {
    %c0_i32 = arith.constant 0 : i32
    %c0_i32_0 = arith.constant 0 : i32
    %c0_i32_1 = arith.constant 0 : i32
    return %c0_i32, %c0_i32_0 : i32, i32
  }
  func.func @transform_5(%arg0: i32) -> (i32, i32) {
    %c0_i32 = arith.constant 0 : i32
    %c0_i32_0 = arith.constant 0 : i32
    %c0_i32_1 = arith.constant 0 : i32
    return %c0_i32, %c0_i32_0 : i32, i32
  }
  func.func @transform_6(%arg0: i32) -> (i32, i32) {
    %c0_i32 = arith.constant 0 : i32
    %c0_i32_0 = arith.constant 0 : i32
    %c0_i32_1 = arith.constant 0 : i32
    return %c0_i32, %c0_i32_0 : i32, i32
  }
  func.func @transform_7(%arg0: i32) -> (i32, i32) {
    %c0_i32 = arith.constant 0 : i32
    %c0_i32_0 = arith.constant 0 : i32
    return %arg0, %c0_i32 : i32, i32
  }
}

</mosaic_0001>

<llo_original>
// kernel: tpu_custom_call.1
$region0: #{tpu_custom_call.1}
  #allocation0 [shape = 'u32[]', space=smem, size = 0x4, offset = 0x4, fixed_abs, tag = 'smem constant byte address 0x4 - core index']
  #allocation1 [shape = 'u32[144,128]{1,0:T(1,128)}', space=vmem, size = 0x12000, scoped, tag = 'internal scratch']
  %s0 = inlined_call_operand.vmem [shape: f32[2,784], index: 0, kind: input, shape index: {}]
  %s1 = inlined_call_operand.vmem [shape: bf16[784,300], index: 1, kind: input, shape index: {}]
  %s2 = inlined_call_operand.vmem [shape: f32[1,300], index: 2, kind: input, shape index: {}]
  %s3 = inlined_call_operand.vmem [shape: bf16[300,128], index: 3, kind: input, shape index: {}]
  %s4 = inlined_call_operand.vmem [shape: f32[1,128], index: 4, kind: input, shape index: {}]
  %s5 = inlined_call_operand.vmem [shape: bf16[128,128], index: 5, kind: input, shape index: {}]
  %s6 = inlined_call_operand.vmem [shape: f32[1,128], index: 6, kind: input, shape index: {}]
  %s7 = inlined_call_operand.hbm [shape: bf16[2,128], index: 7, kind: output, shape index: {}]
  %s8 = sld [smem:[#allocation0]]
  $region38: #{tpu_custom_call.1} parent=0
    _
  %s10 = ssub.s32 1, %s8
  %s11 = scalar_select 0, %s10, %s8
  $region1: #{tpu_custom_call.1} parent=0
    #allocation2 [shape = 'u8[4096]{0}', space=vmem, size = 0x1000, scoped, tag = 'output window, operand 0, single buffered']
    #allocation3 [shape = 's32[1]{0}', space=sflag, size = 0x4, scoped, tag = 'scoped memory for tpu_custom_call.1']
    %12 = vsyncpa [#allocation3], 0
    // Predicated region
    $region2: #{tpu_custom_call.1} parent=1 // pred_check
      _
    $region3: #{tpu_custom_call.1} parent=1 // pred_check_branch
      %14 = sbr.rel (0) target = $region5
    $region4: #{tpu_custom_call.1} parent=1 // pred_region
      _
    $region5: #{tpu_custom_call.1} parent=1 // pred_fallthru
      _
    // Predicated region
    $region6: #{tpu_custom_call.1} parent=1 // pred_check
      _
    $region7: #{tpu_custom_call.1} parent=1 // pred_check_branch
      %16 = sbr.rel (0) target = $region9
    $region8: #{tpu_custom_call.1} parent=1 // pred_region
      _
    $region9: #{tpu_custom_call.1} parent=1 // pred_fallthru
      _
    // Predicated region
    $region10: #{tpu_custom_call.1} parent=1 // pred_check
      _
    $region11: #{tpu_custom_call.1} parent=1 // pred_check_branch
      %18 = sbr.rel (0) target = $region13
    $region12: #{tpu_custom_call.1} parent=1 // pred_region
      _
    $region13: #{tpu_custom_call.1} parent=1 // pred_fallthru
      _
    // Predicated region
    $region14: #{tpu_custom_call.1} parent=1 // pred_check
      _
    $region15: #{tpu_custom_call.1} parent=1 // pred_check_branch
      %20 = sbr.rel (0) target = $region17
    $region16: #{tpu_custom_call.1} parent=1 // pred_region
      _
    $region17: #{tpu_custom_call.1} parent=1 // pred_fallthru
      _
    // Predicated region
    $region18: #{tpu_custom_call.1} parent=1 // pred_check
      _
    $region19: #{tpu_custom_call.1} parent=1 // pred_check_branch
      %22 = sbr.rel (0) target = $region21
    $region20: #{tpu_custom_call.1} parent=1 // pred_region
      _
    $region21: #{tpu_custom_call.1} parent=1 // pred_fallthru
      _
    // Predicated region
    $region22: #{tpu_custom_call.1} parent=1 // pred_check
      _
    $region23: #{tpu_custom_call.1} parent=1 // pred_check_branch
      %24 = sbr.rel (0) target = $region25
    $region24: #{tpu_custom_call.1} parent=1 // pred_region
      _
    $region25: #{tpu_custom_call.1} parent=1 // pred_fallthru
      _
    // Predicated region
    $region26: #{tpu_custom_call.1} parent=1 // pred_check
      _
    $region27: #{tpu_custom_call.1} parent=1 // pred_check_branch
      %26 = sbr.rel (0) target = $region29
    $region28: #{tpu_custom_call.1} parent=1 // pred_region
      _
    $region29: #{tpu_custom_call.1} parent=1 // pred_fallthru
      _
    %v28 = vld [vmem:[%s0] sm:$0xff]
    %v29 = vld [vmem:[%s0 + $0x8] sm:$0x3f]
    %v30 = vld [vmem:[%s0 + $0xe] sm:$0xff]
    %v31 = vld [vmem:[%s0 + $0x16] sm:$0x3f]
    %v32 = vld [vmem:[%s0 + $0x1c] sm:$0xff]
    %v33 = vld [vmem:[%s0 + $0x24] sm:$0x3f]
    %v34 = vld [vmem:[%s0 + $0x2a] sm:$0xff]
    %v35 = vld [vmem:[%s0 + $0x32] sm:$0x3f]
    %v36 = vld [vmem:[%s0 + $0x38] sm:$0xff]
    %v37 = vld [vmem:[%s0 + $0x40] sm:$0x3f]
    %v38 = vld [vmem:[%s0 + $0x46] sm:$0xff]
    %v39 = vld [vmem:[%s0 + $0x4e] sm:$0x3f]
    %v40 = vld [vmem:[%s0 + $0x54] sm:$0xff]
    %v41 = vld [vmem:[%s0 + $0x5c] sm:$0x3f]
    %v42 = vld [vmem:[%s0 + $0x62] sm:$0xff]
    %v43 = vld [vmem:[%s0 + $0x6a] sm:$0x3f]
    %v60 = vcombine.low %v28, %v30
    %v61 = vcombine.high %v28, %v30
    %v62 = vcombine.low %v32, %v34
    %v63 = vcombine.high %v32, %v34
    %v65 = vunpack.c.l.s4 1983009808
    %v66 = vunpack.c.0.s8 %v65
    %v67 = vlaneseq
    %v68 = vshrl.u32 %v67, 7
    %v69 = vsub.s32 %v66, %v68
    %v70 = vrot.slane %v60, %v69
    %v72 = vunpack.c.l.s4 1983009808
    %v73 = vunpack.c.0.s8 %v72
    %v74 = vlaneseq
    %v75 = vshrl.u32 %v74, 7
    %v76 = vsub.s32 %v73, %v75
    %v77 = vrot.slane %v61, %v76
    %v79 = vunpack.c.l.s4 1983009808
    %v80 = vunpack.c.0.s8 %v79
    %v81 = vlaneseq
    %v82 = vshrl.u32 %v81, 7
    %v83 = vsub.s32 %v80, %v82
    %v84 = vrot.slane %v62, %v83
    %v86 = vunpack.c.l.s4 1983009808
    %v87 = vunpack.c.0.s8 %v86
    %v88 = vlaneseq
    %v89 = vshrl.u32 %v88, 7
    %v90 = vsub.s32 %v87, %v89
    %v91 = vrot.slane %v63, %v90
    %v92 = vcombine.low %v70, %v84
    %v93 = vcombine.high %v70, %v84
    %v94 = vcombine.low %v77, %v91
    %v95 = vcombine.high %v77, %v91
    %v96 = vcombine.low %v29, %v31
    %v97 = vcombine.high %v29, %v31
    %v98 = vcombine.low %v33, %v35
    %v99 = vcombine.high %v33, %v35
    %v101 = vunpack.c.l.s4 1983009808
    %v102 = vunpack.c.0.s8 %v101
    %v103 = vlaneseq
    %v104 = vshrl.u32 %v103, 7
    %v105 = vsub.s32 %v102, %v104
    %v106 = vrot.slane %v96, %v105
    %v108 = vunpack.c.l.s4 1983009808
    %v109 = vunpack.c.0.s8 %v108
    %v110 = vlaneseq
    %v111 = vshrl.u32 %v110, 7
    %v112 = vsub.s32 %v109, %v111
    %v113 = vrot.slane %v97, %v112
    %v115 = vunpack.c.l.s4 1983009808
    %v116 = vunpack.c.0.s8 %v115
    %v117 = vlaneseq
    %v118 = vshrl.u32 %v117, 7
    %v119 = vsub.s32 %v116, %v118
    %v120 = vrot.slane %v98, %v119
    %v122 = vunpack.c.l.s4 1983009808
    %v123 = vunpack.c.0.s8 %v122
    %v124 = vlaneseq
    %v125 = vshrl.u32 %v124, 7
    %v126 = vsub.s32 %v123, %v125
    %v127 = vrot.slane %v99, %v126
    %v128 = vcombine.low %v106, %v120
    %v129 = vcombine.high %v106, %v120
    %v130 = vcombine.low %v113, %v127
    %v131 = vcombine.low %v36, %v38
    %v132 = vcombine.high %v36, %v38
    %v133 = vcombine.low %v40, %v42
    %v134 = vcombine.high %v40, %v42
    %v136 = vunpack.c.l.s4 1983009808
    %v137 = vunpack.c.0.s8 %v136
    %v138 = vlaneseq
    %v139 = vshrl.u32 %v138, 7
    %v140 = vsub.s32 %v137, %v139
    %v141 = vrot.slane %v131, %v140
    %v143 = vunpack.c.l.s4 1983009808
    %v144 = vunpack.c.0.s8 %v143
    %v145 = vlaneseq
    %v146 = vshrl.u32 %v145, 7
    %v147 = vsub.s32 %v144, %v146
    %v148 = vrot.slane %v132, %v147
    %v150 = vunpack.c.l.s4 1983009808
    %v151 = vunpack.c.0.s8 %v150
    %v152 = vlaneseq
    %v153 = vshrl.u32 %v152, 7
    %v154 = vsub.s32 %v151, %v153
    %v155 = vrot.slane %v133, %v154
    %v157 = vunpack.c.l.s4 1983009808
    %v158 = vunpack.c.0.s8 %v157
    %v159 = vlaneseq
    %v160 = vshrl.u32 %v159, 7
    %v161 = vsub.s32 %v158, %v160
    %v162 = vrot.slane %v134, %v161
    %v163 = vcombine.low %v141, %v155
    %v164 = vcombine.high %v141, %v155
    %v165 = vcombine.low %v148, %v162
    %v166 = vcombine.high %v148, %v162
    %v167 = vcombine.low %v37, %v39
    %v168 = vcombine.high %v37, %v39
    %v169 = vcombine.low %v41, %v43
    %v170 = vcombine.high %v41, %v43
    %v172 = vunpack.c.l.s4 1983009808
    %v173 = vunpack.c.0.s8 %v172
    %v174 = vlaneseq
    %v175 = vshrl.u32 %v174, 7
    %v176 = vsub.s32 %v173, %v175
    %v177 = vrot.slane %v167, %v176
    %v179 = vunpack.c.l.s4 1983009808
    %v180 = vunpack.c.0.s8 %v179
    %v181 = vlaneseq
    %v182 = vshrl.u32 %v181, 7
    %v183 = vsub.s32 %v180, %v182
    %v184 = vrot.slane %v168, %v183
    %v186 = vunpack.c.l.s4 1983009808
    %v187 = vunpack.c.0.s8 %v186
    %v188 = vlaneseq
    %v189 = vshrl.u32 %v188, 7
    %v190 = vsub.s32 %v187, %v189
    %v191 = vrot.slane %v169, %v190
    %v193 = vunpack.c.l.s4 1983009808
    %v194 = vunpack.c.0.s8 %v193
    %v195 = vlaneseq
    %v196 = vshrl.u32 %v195, 7
    %v197 = vsub.s32 %v194, %v196
    %v198 = vrot.slane %v170, %v197
    %v199 = vcombine.low %v177, %v191
    %v200 = vcombine.high %v177, %v191
    %v201 = vcombine.low %v184, %v198
    %v216 = vpack.c.bf16 %v163, %v92
    %v217 = vpack.c.bf16 %v164, %v93
    %v218 = vpack.c.bf16 %v165, %v94
    %v219 = vpack.c.bf16 %v166, %v95
    %v220 = vpack.c.bf16 %v199, %v128
    %v221 = vpack.c.bf16 %v200, %v129
    %v222 = vpack.c.bf16 %v201, %v130
    %v223 = vld [vmem:[%s1] sm:$0xff]
    %v224 = vld [vmem:[%s1 + $0x8] sm:$0xf]
    %v225 = vld [vmem:[%s1 + $0xc] sm:$0xff]
    %v226 = vld [vmem:[%s1 + $0x14] sm:$0xf]
    %v227 = vld [vmem:[%s1 + $0x18] sm:$0xff]
    %v228 = vld [vmem:[%s1 + $0x20] sm:$0xf]
    %v229 = vld [vmem:[%s1 + $0x24] sm:$0xff]
    %v230 = vld [vmem:[%s1 + $0x2c] sm:$0xf]
    %v231 = vld [vmem:[%s1 + $0x30] sm:$0xff]
    %v232 = vld [vmem:[%s1 + $0x38] sm:$0xf]
    %v233 = vld [vmem:[%s1 + $0x3c] sm:$0xff]
    %v234 = vld [vmem:[%s1 + $0x44] sm:$0xf]
    %v235 = vld [vmem:[%s1 + $0x48] sm:$0xff]
    %v236 = vld [vmem:[%s1 + $0x50] sm:$0xf]
    %v237 = vld [vmem:[%s1 + $0x54] sm:$0xff]
    %v238 = vld [vmem:[%s1 + $0x5c] sm:$0xf]
    %v239 = vld [vmem:[%s1 + $0x60] sm:$0xff]
    %v240 = vld [vmem:[%s1 + $0x68] sm:$0xf]
    %v241 = vld [vmem:[%s1 + $0x6c] sm:$0xff]
    %v242 = vld [vmem:[%s1 + $0x74] sm:$0xf]
    %v243 = vld [vmem:[%s1 + $0x78] sm:$0xff]
    %v244 = vld [vmem:[%s1 + $0x80] sm:$0xf]
    %v245 = vld [vmem:[%s1 + $0x84] sm:$0xff]
    %v246 = vld [vmem:[%s1 + $0x8c] sm:$0xf]
    %v247 = vld [vmem:[%s1 + $0x90] sm:$0xff]
    %v248 = vld [vmem:[%s1 + $0x98] sm:$0xf]
    %v249 = vld [vmem:[%s1 + $0x9c] sm:$0xff]
    %v250 = vld [vmem:[%s1 + $0xa4] sm:$0xf]
    %v251 = vld [vmem:[%s1 + $0xa8] sm:$0xff]
    %v252 = vld [vmem:[%s1 + $0xb0] sm:$0xf]
    %v253 = vld [vmem:[%s1 + $0xb4] sm:$0xff]
    %v254 = vld [vmem:[%s1 + $0xbc] sm:$0xf]
    %v255 = vld [vmem:[%s1 + $0xc0] sm:$0xff]
    %v256 = vld [vmem:[%s1 + $0xc8] sm:$0xf]
    %v257 = vld [vmem:[%s1 + $0xcc] sm:$0xff]
    %v258 = vld [vmem:[%s1 + $0xd4] sm:$0xf]
    %v259 = vld [vmem:[%s1 + $0xd8] sm:$0xff]
    %v260 = vld [vmem:[%s1 + $0xe0] sm:$0xf]
    %v261 = vld [vmem:[%s1 + $0xe4] sm:$0xff]
    %v262 = vld [vmem:[%s1 + $0xec] sm:$0xf]
    %v263 = vld [vmem:[%s1 + $0xf0] sm:$0xff]
    %v264 = vld [vmem:[%s1 + $0xf8] sm:$0xf]
    %v265 = vld [vmem:[%s1 + $0xfc] sm:$0xff]
    %v266 = vld [vmem:[%s1 + $0x104] sm:$0xf]
    %v267 = vld [vmem:[%s1 + $0x108] sm:$0xff]
    %v268 = vld [vmem:[%s1 + $0x110] sm:$0xf]
    %v269 = vld [vmem:[%s1 + $0x114] sm:$0xff]
    %v270 = vld [vmem:[%s1 + $0x11c] sm:$0xf]
    %v271 = vld [vmem:[%s1 + $0x120] sm:$0xff]
    %v272 = vld [vmem:[%s1 + $0x128] sm:$0xf]
    %v273 = vld [vmem:[%s1 + $0x12c] sm:$0xff]
    %v274 = vld [vmem:[%s1 + $0x134] sm:$0xf]
    %v275 = vld [vmem:[%s1 + $0x138] sm:$0xff]
    %v276 = vld [vmem:[%s1 + $0x140] sm:$0xf]
    %v277 = vld [vmem:[%s1 + $0x144] sm:$0xff]
    %v278 = vld [vmem:[%s1 + $0x14c] sm:$0xf]
    %v279 = vld [vmem:[%s1 + $0x150] sm:$0xff]
    %v280 = vld [vmem:[%s1 + $0x158] sm:$0xf]
    %v281 = vld [vmem:[%s1 + $0x15c] sm:$0xff]
    %v282 = vld [vmem:[%s1 + $0x164] sm:$0xf]
    %v283 = vld [vmem:[%s1 + $0x168] sm:$0xff]
    %v284 = vld [vmem:[%s1 + $0x170] sm:$0xf]
    %v285 = vld [vmem:[%s1 + $0x174] sm:$0xff]
    %v286 = vld [vmem:[%s1 + $0x17c] sm:$0xf]
    %v287 = vld [vmem:[%s1 + $0x180] sm:$0xff]
    %v288 = vld [vmem:[%s1 + $0x188] sm:$0xf]
    %v289 = vld [vmem:[%s1 + $0x18c] sm:$0xff]
    %v290 = vld [vmem:[%s1 + $0x194] sm:$0xf]
    %v291 = vld [vmem:[%s1 + $0x198] sm:$0xff]
    %v292 = vld [vmem:[%s1 + $0x1a0] sm:$0xf]
    %v293 = vld [vmem:[%s1 + $0x1a4] sm:$0xff]
    %v294 = vld [vmem:[%s1 + $0x1ac] sm:$0xf]
    %v295 = vld [vmem:[%s1 + $0x1b0] sm:$0xff]
    %v296 = vld [vmem:[%s1 + $0x1b8] sm:$0xf]
    %v297 = vld [vmem:[%s1 + $0x1bc] sm:$0xff]
    %v298 = vld [vmem:[%s1 + $0x1c4] sm:$0xf]
    %v299 = vld [vmem:[%s1 + $0x1c8] sm:$0xff]
    %v300 = vld [vmem:[%s1 + $0x1d0] sm:$0xf]
    %v301 = vld [vmem:[%s1 + $0x1d4] sm:$0xff]
    %v302 = vld [vmem:[%s1 + $0x1dc] sm:$0xf]
    %v303 = vld [vmem:[%s1 + $0x1e0] sm:$0xff]
    %v304 = vld [vmem:[%s1 + $0x1e8] sm:$0xf]
    %v305 = vld [vmem:[%s1 + $0x1ec] sm:$0xff]
    %v306 = vld [vmem:[%s1 + $0x1f4] sm:$0xf]
    %v307 = vld [vmem:[%s1 + $0x1f8] sm:$0xff]
    %v308 = vld [vmem:[%s1 + $0x200] sm:$0xf]
    %v309 = vld [vmem:[%s1 + $0x204] sm:$0xff]
    %v310 = vld [vmem:[%s1 + $0x20c] sm:$0xf]
    %v311 = vld [vmem:[%s1 + $0x210] sm:$0xff]
    %v312 = vld [vmem:[%s1 + $0x218] sm:$0xf]
    %v313 = vld [vmem:[%s1 + $0x21c] sm:$0xff]
    %v314 = vld [vmem:[%s1 + $0x224] sm:$0xf]
    %v315 = vld [vmem:[%s1 + $0x228] sm:$0xff]
    %v316 = vld [vmem:[%s1 + $0x230] sm:$0xf]
    %v317 = vld [vmem:[%s1 + $0x234] sm:$0xff]
    %v318 = vld [vmem:[%s1 + $0x23c] sm:$0xf]
    %v319 = vld [vmem:[%s1 + $0x240] sm:$0xff]
    %v320 = vld [vmem:[%s1 + $0x248] sm:$0xf]
    %v321 = vld [vmem:[%s1 + $0x24c] sm:$0xff]
    %v322 = vld [vmem:[%s1 + $0x254] sm:$0xf]
    %v323 = vld [vmem:[%s1 + $0x258] sm:$0xff]
    %v324 = vld [vmem:[%s1 + $0x260] sm:$0xf]
    %v325 = vld [vmem:[%s1 + $0x264] sm:$0xff]
    %v326 = vld [vmem:[%s1 + $0x26c] sm:$0xf]
    %v327 = vld [vmem:[%s1 + $0x270] sm:$0xff]
    %v328 = vld [vmem:[%s1 + $0x278] sm:$0xf]
    %v329 = vld [vmem:[%s1 + $0x27c] sm:$0xff]
    %v330 = vld [vmem:[%s1 + $0x284] sm:$0xf]
    %v331 = vld [vmem:[%s1 + $0x288] sm:$0xff]
    %v332 = vld [vmem:[%s1 + $0x290] sm:$0xf]
    %v333 = vld [vmem:[%s1 + $0x294] sm:$0xff]
    %v334 = vld [vmem:[%s1 + $0x29c] sm:$0xf]
    %v335 = vld [vmem:[%s1 + $0x2a0] sm:$0xff]
    %v336 = vld [vmem:[%s1 + $0x2a8] sm:$0xf]
    %v337 = vld [vmem:[%s1 + $0x2ac] sm:$0xff]
    %v338 = vld [vmem:[%s1 + $0x2b4] sm:$0xf]
    %v339 = vld [vmem:[%s1 + $0x2b8] sm:$0xff]
    %v340 = vld [vmem:[%s1 + $0x2c0] sm:$0xf]
    %v341 = vld [vmem:[%s1 + $0x2c4] sm:$0xff]
    %v342 = vld [vmem:[%s1 + $0x2cc] sm:$0xf]
    %v343 = vld [vmem:[%s1 + $0x2d0] sm:$0xff]
    %v344 = vld [vmem:[%s1 + $0x2d8] sm:$0xf]
    %v345 = vld [vmem:[%s1 + $0x2dc] sm:$0xff]
    %v346 = vld [vmem:[%s1 + $0x2e4] sm:$0xf]
    %v347 = vld [vmem:[%s1 + $0x2e8] sm:$0xff]
    %v348 = vld [vmem:[%s1 + $0x2f0] sm:$0xf]
    %v349 = vld [vmem:[%s1 + $0x2f4] sm:$0xff]
    %v350 = vld [vmem:[%s1 + $0x2fc] sm:$0xf]
    %v351 = vld [vmem:[%s1 + $0x300] sm:$0xff]
    %v352 = vld [vmem:[%s1 + $0x308] sm:$0xf]
    %v353 = vld [vmem:[%s1 + $0x30c] sm:$0xff]
    %v354 = vld [vmem:[%s1 + $0x314] sm:$0xf]
    %v355 = vld [vmem:[%s1 + $0x318] sm:$0xff]
    %v356 = vld [vmem:[%s1 + $0x320] sm:$0xf]
    %v357 = vld [vmem:[%s1 + $0x324] sm:$0xff]
    %v358 = vld [vmem:[%s1 + $0x32c] sm:$0xf]
    %v359 = vld [vmem:[%s1 + $0x330] sm:$0xff]
    %v360 = vld [vmem:[%s1 + $0x338] sm:$0xf]
    %v361 = vld [vmem:[%s1 + $0x33c] sm:$0xff]
    %v362 = vld [vmem:[%s1 + $0x344] sm:$0xf]
    %v363 = vld [vmem:[%s1 + $0x348] sm:$0xff]
    %v364 = vld [vmem:[%s1 + $0x350] sm:$0xf]
    %v365 = vld [vmem:[%s1 + $0x354] sm:$0xff]
    %v366 = vld [vmem:[%s1 + $0x35c] sm:$0xf]
    %v367 = vld [vmem:[%s1 + $0x360] sm:$0xff]
    %v368 = vld [vmem:[%s1 + $0x368] sm:$0xf]
    %v369 = vld [vmem:[%s1 + $0x36c] sm:$0xff]
    %v370 = vld [vmem:[%s1 + $0x374] sm:$0xf]
    %v371 = vld [vmem:[%s1 + $0x378] sm:$0xff]
    %v372 = vld [vmem:[%s1 + $0x380] sm:$0xf]
    %v373 = vld [vmem:[%s1 + $0x384] sm:$0xff]
    %v374 = vld [vmem:[%s1 + $0x38c] sm:$0xf]
    %v375 = vld [vmem:[%s1 + $0x390] sm:$0xff]
    %v376 = vld [vmem:[%s1 + $0x398] sm:$0xf]
    %v377 = vld [vmem:[%s1 + $0x39c] sm:$0xff]
    %v378 = vld [vmem:[%s1 + $0x3a4] sm:$0xf]
    %v379 = vld [vmem:[%s1 + $0x3a8] sm:$0xff]
    %v380 = vld [vmem:[%s1 + $0x3b0] sm:$0xf]
    %v381 = vld [vmem:[%s1 + $0x3b4] sm:$0xff]
    %v382 = vld [vmem:[%s1 + $0x3bc] sm:$0xf]
    %v383 = vld [vmem:[%s1 + $0x3c0] sm:$0xff]
    %v384 = vld [vmem:[%s1 + $0x3c8] sm:$0xf]
    %v385 = vld [vmem:[%s1 + $0x3cc] sm:$0xff]
    %v386 = vld [vmem:[%s1 + $0x3d4] sm:$0xf]
    %v387 = vld [vmem:[%s1 + $0x3d8] sm:$0xff]
    %v388 = vld [vmem:[%s1 + $0x3e0] sm:$0xf]
    %v389 = vld [vmem:[%s1 + $0x3e4] sm:$0xff]
    %v390 = vld [vmem:[%s1 + $0x3ec] sm:$0xf]
    %v391 = vld [vmem:[%s1 + $0x3f0] sm:$0xff]
    %v392 = vld [vmem:[%s1 + $0x3f8] sm:$0xf]
    %v393 = vld [vmem:[%s1 + $0x3fc] sm:$0xff]
    %v394 = vld [vmem:[%s1 + $0x404] sm:$0xf]
    %v395 = vld [vmem:[%s1 + $0x408] sm:$0xff]
    %v396 = vld [vmem:[%s1 + $0x410] sm:$0xf]
    %v397 = vld [vmem:[%s1 + $0x414] sm:$0xff]
    %v398 = vld [vmem:[%s1 + $0x41c] sm:$0xf]
    %v399 = vld [vmem:[%s1 + $0x420] sm:$0xff]
    %v400 = vld [vmem:[%s1 + $0x428] sm:$0xf]
    %v401 = vld [vmem:[%s1 + $0x42c] sm:$0xff]
    %v402 = vld [vmem:[%s1 + $0x434] sm:$0xf]
    %v403 = vld [vmem:[%s1 + $0x438] sm:$0xff]
    %v404 = vld [vmem:[%s1 + $0x440] sm:$0xf]
    %v405 = vld [vmem:[%s1 + $0x444] sm:$0xff]
    %v406 = vld [vmem:[%s1 + $0x44c] sm:$0xf]
    %v407 = vld [vmem:[%s1 + $0x450] sm:$0xff]
    %v408 = vld [vmem:[%s1 + $0x458] sm:$0xf]
    %v409 = vld [vmem:[%s1 + $0x45c] sm:$0xff]
    %v410 = vld [vmem:[%s1 + $0x464] sm:$0xf]
    %v411 = vld [vmem:[%s1 + $0x468] sm:$0xff]
    %v412 = vld [vmem:[%s1 + $0x470] sm:$0xf]
    %v413 = vld [vmem:[%s1 + $0x474] sm:$0xff]
    %v414 = vld [vmem:[%s1 + $0x47c] sm:$0xf]
    %v415 = vld [vmem:[%s1 + $0x480] sm:$0xff]
    %v416 = vld [vmem:[%s1 + $0x488] sm:$0xf]
    %v417 = vld [vmem:[%s1 + $0x48c] sm:$0xff]
    %v418 = vld [vmem:[%s1 + $0x494] sm:$0xf]
    %v419 = vld [vmem:[%s2] sm:$0x7]
    %v421 = vlaneseq
    %v422 = vshrl.u32 %v421, 7
    %v423 = vsub.s32 0, %v422
    %v424 = vrot.slane %v419, %v423
    %v425 = vlaneseq
    %v426 = vshrl.u32 %v425, 7
    %v427 = vsub.s32 1, %v426
    %v428 = vrot.slane %v419, %v427
    %v429 = vlaneseq
    %v430 = vshrl.u32 %v429, 7
    %v431 = vsub.s32 2, %v430
    %v432 = vrot.slane %v419, %v431
    %v632 = vunpack.c.l.b16 %v223
    %v633 = vunpack.c.h.b16 %v223
    %v634 = vunpack.c.l.b16 %v224
    %v635 = vunpack.c.l.b16 %v225
    %v636 = vunpack.c.h.b16 %v225
    %v637 = vunpack.c.l.b16 %v226
    %v638 = vunpack.c.l.b16 %v227
    %v639 = vunpack.c.h.b16 %v227
    %v640 = vunpack.c.l.b16 %v228
    %v641 = vunpack.c.l.b16 %v229
    %v642 = vunpack.c.h.b16 %v229
    %v643 = vunpack.c.l.b16 %v230
    %v644 = vunpack.c.l.b16 %v231
    %v645 = vunpack.c.h.b16 %v231
    %v646 = vunpack.c.l.b16 %v232
    %v647 = vunpack.c.l.b16 %v233
    %v648 = vunpack.c.h.b16 %v233
    %v649 = vunpack.c.l.b16 %v234
    %v650 = vunpack.c.l.b16 %v235
    %v651 = vunpack.c.h.b16 %v235
    %v652 = vunpack.c.l.b16 %v236
    %v653 = vunpack.c.l.b16 %v237
    %v654 = vunpack.c.h.b16 %v237
    %v655 = vunpack.c.l.b16 %v238
    %v656 = vunpack.c.l.b16 %v239
    %v657 = vunpack.c.h.b16 %v239
    %v658 = vunpack.c.l.b16 %v240
    %v659 = vunpack.c.l.b16 %v241
    %v660 = vunpack.c.h.b16 %v241
    %v661 = vunpack.c.l.b16 %v242
    %v662 = vunpack.c.l.b16 %v243
    %v663 = vunpack.c.h.b16 %v243
    %v664 = vunpack.c.l.b16 %v244
    %v665 = vunpack.c.l.b16 %v245
    %v666 = vunpack.c.h.b16 %v245
    %v667 = vunpack.c.l.b16 %v246
    %v668 = vunpack.c.l.b16 %v247
    %v669 = vunpack.c.h.b16 %v247
    %v670 = vunpack.c.l.b16 %v248
    %v671 = vunpack.c.l.b16 %v249
    %v672 = vunpack.c.h.b16 %v249
    %v673 = vunpack.c.l.b16 %v250
    %v674 = vunpack.c.l.b16 %v251
    %v675 = vunpack.c.h.b16 %v251
    %v676 = vunpack.c.l.b16 %v252
    %v677 = vunpack.c.l.b16 %v253
    %v678 = vunpack.c.h.b16 %v253
    %v679 = vunpack.c.l.b16 %v254
    %v680 = vunpack.c.l.b16 %v255
    %v681 = vunpack.c.h.b16 %v255
    %v682 = vunpack.c.l.b16 %v256
    %v683 = vunpack.c.l.b16 %v257
    %v684 = vunpack.c.h.b16 %v257
    %v685 = vunpack.c.l.b16 %v258
    %v686 = vunpack.c.l.b16 %v259
    %v687 = vunpack.c.h.b16 %v259
    %v688 = vunpack.c.l.b16 %v260
    %v689 = vunpack.c.l.b16 %v261
    %v690 = vunpack.c.h.b16 %v261
    %v691 = vunpack.c.l.b16 %v262
    %v692 = vunpack.c.l.b16 %v263
    %v693 = vunpack.c.h.b16 %v263
    %v694 = vunpack.c.l.b16 %v264
    %v695 = vunpack.c.l.b16 %v265
    %v696 = vunpack.c.h.b16 %v265
    %v697 = vunpack.c.l.b16 %v266
    %v698 = vunpack.c.l.b16 %v267
    %v699 = vunpack.c.h.b16 %v267
    %v700 = vunpack.c.l.b16 %v268
    %v701 = vunpack.c.l.b16 %v269
    %v702 = vunpack.c.h.b16 %v269
    %v703 = vunpack.c.l.b16 %v270
    %v704 = vunpack.c.l.b16 %v271
    %v705 = vunpack.c.h.b16 %v271
    %v706 = vunpack.c.l.b16 %v272
    %v707 = vunpack.c.l.b16 %v273
    %v708 = vunpack.c.h.b16 %v273
    %v709 = vunpack.c.l.b16 %v274
    %v710 = vunpack.c.l.b16 %v275
    %v711 = vunpack.c.h.b16 %v275
    %v712 = vunpack.c.l.b16 %v276
    %v713 = vunpack.c.l.b16 %v277
    %v714 = vunpack.c.h.b16 %v277
    %v715 = vunpack.c.l.b16 %v278
    %v716 = vunpack.c.l.b16 %v279
    %v717 = vunpack.c.h.b16 %v279
    %v718 = vunpack.c.l.b16 %v280
    %v719 = vunpack.c.l.b16 %v281
    %v720 = vunpack.c.h.b16 %v281
    %v721 = vunpack.c.l.b16 %v282
    %v722 = vunpack.c.l.b16 %v283
    %v723 = vunpack.c.h.b16 %v283
    %v724 = vunpack.c.l.b16 %v284
    %v725 = vunpack.c.l.b16 %v285
    %v726 = vunpack.c.h.b16 %v285
    %v727 = vunpack.c.l.b16 %v286
    %v728 = vunpack.c.l.b16 %v287
    %v729 = vunpack.c.h.b16 %v287
    %v730 = vunpack.c.l.b16 %v288
    %v731 = vunpack.c.l.b16 %v289
    %v732 = vunpack.c.h.b16 %v289
    %v733 = vunpack.c.l.b16 %v290
    %v734 = vunpack.c.l.b16 %v291
    %v735 = vunpack.c.h.b16 %v291
    %v736 = vunpack.c.l.b16 %v292
    %v737 = vunpack.c.l.b16 %v293
    %v738 = vunpack.c.h.b16 %v293
    %v739 = vunpack.c.l.b16 %v294
    %v740 = vunpack.c.l.b16 %v295
    %v741 = vunpack.c.h.b16 %v295
    %v742 = vunpack.c.l.b16 %v296
    %v743 = vunpack.c.l.b16 %v297
    %v744 = vunpack.c.h.b16 %v297
    %v745 = vunpack.c.l.b16 %v298
    %v746 = vunpack.c.l.b16 %v299
    %v747 = vunpack.c.h.b16 %v299
    %v748 = vunpack.c.l.b16 %v300
    %v749 = vunpack.c.l.b16 %v301
    %v750 = vunpack.c.h.b16 %v301
    %v751 = vunpack.c.l.b16 %v302
    %v752 = vunpack.c.l.b16 %v303
    %v753 = vunpack.c.h.b16 %v303
    %v754 = vunpack.c.l.b16 %v304
    %v755 = vunpack.c.l.b16 %v305
    %v756 = vunpack.c.h.b16 %v305
    %v757 = vunpack.c.l.b16 %v306
    %v758 = vunpack.c.l.b16 %v307
    %v759 = vunpack.c.h.b16 %v307
    %v760 = vunpack.c.l.b16 %v308
    %v761 = vunpack.c.l.b16 %v309
    %v762 = vunpack.c.h.b16 %v309
    %v763 = vunpack.c.l.b16 %v310
    %v764 = vunpack.c.l.b16 %v311
    %v765 = vunpack.c.h.b16 %v311
    %v766 = vunpack.c.l.b16 %v312
    %v767 = vunpack.c.l.b16 %v313
    %v768 = vunpack.c.h.b16 %v313
    %v769 = vunpack.c.l.b16 %v314
    %v770 = vunpack.c.l.b16 %v315
    %v771 = vunpack.c.h.b16 %v315
    %v772 = vunpack.c.l.b16 %v316
    %v773 = vunpack.c.l.b16 %v317
    %v774 = vunpack.c.h.b16 %v317
    %v775 = vunpack.c.l.b16 %v318
    %v776 = vunpack.c.l.b16 %v319
    %v777 = vunpack.c.h.b16 %v319
    %v778 = vunpack.c.l.b16 %v320
    %v779 = vunpack.c.l.b16 %v321
    %v780 = vunpack.c.h.b16 %v321
    %v781 = vunpack.c.l.b16 %v322
    %v782 = vunpack.c.l.b16 %v323
    %v783 = vunpack.c.h.b16 %v323
    %v784 = vunpack.c.l.b16 %v324
    %v785 = vunpack.c.l.b16 %v325
    %v786 = vunpack.c.h.b16 %v325
    %v787 = vunpack.c.l.b16 %v326
    %v788 = vunpack.c.l.b16 %v327
    %v789 = vunpack.c.h.b16 %v327
    %v790 = vunpack.c.l.b16 %v328
    %v791 = vunpack.c.l.b16 %v329
    %v792 = vunpack.c.h.b16 %v329
    %v793 = vunpack.c.l.b16 %v330
    %v794 = vunpack.c.l.b16 %v331
    %v795 = vunpack.c.h.b16 %v331
    %v796 = vunpack.c.l.b16 %v332
    %v797 = vunpack.c.l.b16 %v333
    %v798 = vunpack.c.h.b16 %v333
    %v799 = vunpack.c.l.b16 %v334
    %v800 = vunpack.c.l.b16 %v335
    %v801 = vunpack.c.h.b16 %v335
    %v802 = vunpack.c.l.b16 %v336
    %v803 = vunpack.c.l.b16 %v337
    %v804 = vunpack.c.h.b16 %v337
    %v805 = vunpack.c.l.b16 %v338
    %v806 = vunpack.c.l.b16 %v339
    %v807 = vunpack.c.h.b16 %v339
    %v808 = vunpack.c.l.b16 %v340
    %v809 = vunpack.c.l.b16 %v341
    %v810 = vunpack.c.h.b16 %v341
    %v811 = vunpack.c.l.b16 %v342
    %v812 = vunpack.c.l.b16 %v343
    %v813 = vunpack.c.h.b16 %v343
    %v814 = vunpack.c.l.b16 %v344
    %v815 = vunpack.c.l.b16 %v345
    %v816 = vunpack.c.h.b16 %v345
    %v817 = vunpack.c.l.b16 %v346
    %v818 = vunpack.c.l.b16 %v347
    %v819 = vunpack.c.h.b16 %v347
    %v820 = vunpack.c.l.b16 %v348
    %v821 = vunpack.c.l.b16 %v349
    %v822 = vunpack.c.h.b16 %v349
    %v823 = vunpack.c.l.b16 %v350
    %v824 = vunpack.c.l.b16 %v351
    %v825 = vunpack.c.h.b16 %v351
    %v826 = vunpack.c.l.b16 %v352
    %v827 = vunpack.c.l.b16 %v353
    %v828 = vunpack.c.h.b16 %v353
    %v829 = vunpack.c.l.b16 %v354
    %v830 = vunpack.c.l.b16 %v355
    %v831 = vunpack.c.h.b16 %v355
    %v832 = vunpack.c.l.b16 %v356
    %v833 = vunpack.c.l.b16 %v357
    %v834 = vunpack.c.h.b16 %v357
    %v835 = vunpack.c.l.b16 %v358
    %v836 = vunpack.c.l.b16 %v359
    %v837 = vunpack.c.h.b16 %v359
    %v838 = vunpack.c.l.b16 %v360
    %v839 = vunpack.c.l.b16 %v361
    %v840 = vunpack.c.h.b16 %v361
    %v841 = vunpack.c.l.b16 %v362
    %v842 = vunpack.c.l.b16 %v363
    %v843 = vunpack.c.h.b16 %v363
    %v844 = vunpack.c.l.b16 %v364
    %v845 = vunpack.c.l.b16 %v365
    %v846 = vunpack.c.h.b16 %v365
    %v847 = vunpack.c.l.b16 %v366
    %v848 = vunpack.c.l.b16 %v367
    %v849 = vunpack.c.h.b16 %v367
    %v850 = vunpack.c.l.b16 %v368
    %v851 = vunpack.c.l.b16 %v369
    %v852 = vunpack.c.h.b16 %v369
    %v853 = vunpack.c.l.b16 %v370
    %v854 = vunpack.c.l.b16 %v371
    %v855 = vunpack.c.h.b16 %v371
    %v856 = vunpack.c.l.b16 %v372
    %v857 = vunpack.c.l.b16 %v373
    %v858 = vunpack.c.h.b16 %v373
    %v859 = vunpack.c.l.b16 %v374
    %v860 = vunpack.c.l.b16 %v375
    %v861 = vunpack.c.h.b16 %v375
    %v862 = vunpack.c.l.b16 %v376
    %v863 = vunpack.c.l.b16 %v377
    %v864 = vunpack.c.h.b16 %v377
    %v865 = vunpack.c.l.b16 %v378
    %v866 = vunpack.c.l.b16 %v379
    %v867 = vunpack.c.h.b16 %v379
    %v868 = vunpack.c.l.b16 %v380
    %v869 = vunpack.c.l.b16 %v381
    %v870 = vunpack.c.h.b16 %v381
    %v871 = vunpack.c.l.b16 %v382
    %v872 = vunpack.c.l.b16 %v383
    %v873 = vunpack.c.h.b16 %v383
    %v874 = vunpack.c.l.b16 %v384
    %v875 = vunpack.c.l.b16 %v385
    %v876 = vunpack.c.h.b16 %v385
    %v877 = vunpack.c.l.b16 %v386
    %v878 = vunpack.c.l.b16 %v387
    %v879 = vunpack.c.h.b16 %v387
    %v880 = vunpack.c.l.b16 %v388
    %v881 = vunpack.c.l.b16 %v389
    %v882 = vunpack.c.h.b16 %v389
    %v883 = vunpack.c.l.b16 %v390
    %v884 = vunpack.c.l.b16 %v391
    %v885 = vunpack.c.h.b16 %v391
    %v886 = vunpack.c.l.b16 %v392
    %v887 = vunpack.c.l.b16 %v393
    %v888 = vunpack.c.h.b16 %v393
    %v889 = vunpack.c.l.b16 %v394
    %v890 = vunpack.c.l.b16 %v395
    %v891 = vunpack.c.h.b16 %v395
    %v892 = vunpack.c.l.b16 %v396
    %v893 = vunpack.c.l.b16 %v397
    %v894 = vunpack.c.h.b16 %v397
    %v895 = vunpack.c.l.b16 %v398
    %v896 = vunpack.c.l.b16 %v399
    %v897 = vunpack.c.h.b16 %v399
    %v898 = vunpack.c.l.b16 %v400
    %v899 = vunpack.c.l.b16 %v401
    %v900 = vunpack.c.h.b16 %v401
    %v901 = vunpack.c.l.b16 %v402
    %v902 = vunpack.c.l.b16 %v403
    %v903 = vunpack.c.h.b16 %v403
    %v904 = vunpack.c.l.b16 %v404
    %v905 = vunpack.c.l.b16 %v405
    %v906 = vunpack.c.h.b16 %v405
    %v907 = vunpack.c.l.b16 %v406
    %v908 = vunpack.c.l.b16 %v407
    %v909 = vunpack.c.h.b16 %v407
    %v910 = vunpack.c.l.b16 %v408
    %v911 = vunpack.c.l.b16 %v409
    %v912 = vunpack.c.h.b16 %v409
    %v913 = vunpack.c.l.b16 %v410
    %v914 = vunpack.c.l.b16 %v411
    %v915 = vunpack.c.h.b16 %v411
    %v916 = vunpack.c.l.b16 %v412
    %v917 = vunpack.c.l.b16 %v413
    %v918 = vunpack.c.h.b16 %v413
    %v919 = vunpack.c.l.b16 %v414
    %v920 = vunpack.c.l.b16 %v415
    %v921 = vunpack.c.h.b16 %v415
    %v922 = vunpack.c.l.b16 %v416
    %v923 = vunpack.c.l.b16 %v417
    %v924 = vunpack.c.h.b16 %v417
    %v925 = vunpack.c.l.b16 %v418
    %v926 = vpack.c.b16 %v635, %v632
    %v927 = vpack.c.b16 %v636, %v633
    %v928 = vpack.c.b16 %v637, %v634
    %v929 = vpack.c.b16 %v641, %v638
    %v930 = vpack.c.b16 %v642, %v639
    %v931 = vpack.c.b16 %v643, %v640
    %v932 = vpack.c.b16 %v647, %v644
    %v933 = vpack.c.b16 %v648, %v645
    %v934 = vpack.c.b16 %v649, %v646
    %v935 = vpack.c.b16 %v653, %v650
    %v936 = vpack.c.b16 %v654, %v651
    %v937 = vpack.c.b16 %v655, %v652
    %v938 = vpack.c.b16 %v659, %v656
    %v939 = vpack.c.b16 %v660, %v657
    %v940 = vpack.c.b16 %v661, %v658
    %v941 = vpack.c.b16 %v665, %v662
    %v942 = vpack.c.b16 %v666, %v663
    %v943 = vpack.c.b16 %v667, %v664
    %v944 = vpack.c.b16 %v671, %v668
    %v945 = vpack.c.b16 %v672, %v669
    %v946 = vpack.c.b16 %v673, %v670
    %v947 = vpack.c.b16 %v677, %v674
    %v948 = vpack.c.b16 %v678, %v675
    %v949 = vpack.c.b16 %v679, %v676
    %v950 = vpack.c.b16 %v683, %v680
    %v951 = vpack.c.b16 %v684, %v681
    %v952 = vpack.c.b16 %v685, %v682
    %v953 = vpack.c.b16 %v689, %v686
    %v954 = vpack.c.b16 %v690, %v687
    %v955 = vpack.c.b16 %v691, %v688
    %v956 = vpack.c.b16 %v695, %v692
    %v957 = vpack.c.b16 %v696, %v693
    %v958 = vpack.c.b16 %v697, %v694
    %v959 = vpack.c.b16 %v701, %v698
    %v960 = vpack.c.b16 %v702, %v699
    %v961 = vpack.c.b16 %v703, %v700
    %v962 = vpack.c.b16 %v707, %v704
    %v963 = vpack.c.b16 %v708, %v705
    %v964 = vpack.c.b16 %v709, %v706
    %v965 = vpack.c.b16 %v713, %v710
    %v966 = vpack.c.b16 %v714, %v711
    %v967 = vpack.c.b16 %v715, %v712
    %v968 = vpack.c.b16 %v719, %v716
    %v969 = vpack.c.b16 %v720, %v717
    %v970 = vpack.c.b16 %v721, %v718
    %v971 = vpack.c.b16 %v725, %v722
    %v972 = vpack.c.b16 %v726, %v723
    %v973 = vpack.c.b16 %v727, %v724
    %v974 = vpack.c.b16 %v731, %v728
    %v975 = vpack.c.b16 %v732, %v729
    %v976 = vpack.c.b16 %v733, %v730
    %v977 = vpack.c.b16 %v737, %v734
    %v978 = vpack.c.b16 %v738, %v735
    %v979 = vpack.c.b16 %v739, %v736
    %v980 = vpack.c.b16 %v743, %v740
    %v981 = vpack.c.b16 %v744, %v741
    %v982 = vpack.c.b16 %v745, %v742
    %v983 = vpack.c.b16 %v749, %v746
    %v984 = vpack.c.b16 %v750, %v747
    %v985 = vpack.c.b16 %v751, %v748
    %v986 = vpack.c.b16 %v755, %v752
    %v987 = vpack.c.b16 %v756, %v753
    %v988 = vpack.c.b16 %v757, %v754
    %v989 = vpack.c.b16 %v761, %v758
    %v990 = vpack.c.b16 %v762, %v759
    %v991 = vpack.c.b16 %v763, %v760
    %v992 = vpack.c.b16 %v767, %v764
    %v993 = vpack.c.b16 %v768, %v765
    %v994 = vpack.c.b16 %v769, %v766
    %v995 = vpack.c.b16 %v773, %v770
    %v996 = vpack.c.b16 %v774, %v771
    %v997 = vpack.c.b16 %v775, %v772
    %v998 = vpack.c.b16 %v779, %v776
    %v999 = vpack.c.b16 %v780, %v777
    %v1000 = vpack.c.b16 %v781, %v778
    %v1001 = vpack.c.b16 %v785, %v782
    %v1002 = vpack.c.b16 %v786, %v783
    %v1003 = vpack.c.b16 %v787, %v784
    %v1004 = vpack.c.b16 %v791, %v788
    %v1005 = vpack.c.b16 %v792, %v789
    %v1006 = vpack.c.b16 %v793, %v790
    %v1007 = vpack.c.b16 %v797, %v794
    %v1008 = vpack.c.b16 %v798, %v795
    %v1009 = vpack.c.b16 %v799, %v796
    %v1010 = vpack.c.b16 %v803, %v800
    %v1011 = vpack.c.b16 %v804, %v801
    %v1012 = vpack.c.b16 %v805, %v802
    %v1013 = vpack.c.b16 %v809, %v806
    %v1014 = vpack.c.b16 %v810, %v807
    %v1015 = vpack.c.b16 %v811, %v808
    %v1016 = vpack.c.b16 %v815, %v812
    %v1017 = vpack.c.b16 %v816, %v813
    %v1018 = vpack.c.b16 %v817, %v814
    %v1019 = vpack.c.b16 %v821, %v818
    %v1020 = vpack.c.b16 %v822, %v819
    %v1021 = vpack.c.b16 %v823, %v820
    %v1022 = vpack.c.b16 %v827, %v824
    %v1023 = vpack.c.b16 %v828, %v825
    %v1024 = vpack.c.b16 %v829, %v826
    %v1025 = vpack.c.b16 %v833, %v830
    %v1026 = vpack.c.b16 %v834, %v831
    %v1027 = vpack.c.b16 %v835, %v832
    %v1028 = vpack.c.b16 %v839, %v836
    %v1029 = vpack.c.b16 %v840, %v837
    %v1030 = vpack.c.b16 %v841, %v838
    %v1031 = vpack.c.b16 %v845, %v842
    %v1032 = vpack.c.b16 %v846, %v843
    %v1033 = vpack.c.b16 %v847, %v844
    %v1034 = vpack.c.b16 %v851, %v848
    %v1035 = vpack.c.b16 %v852, %v849
    %v1036 = vpack.c.b16 %v853, %v850
    %v1037 = vpack.c.b16 %v857, %v854
    %v1038 = vpack.c.b16 %v858, %v855
    %v1039 = vpack.c.b16 %v859, %v856
    %v1040 = vpack.c.b16 %v863, %v860
    %v1041 = vpack.c.b16 %v864, %v861
    %v1042 = vpack.c.b16 %v865, %v862
    %v1043 = vpack.c.b16 %v869, %v866
    %v1044 = vpack.c.b16 %v870, %v867
    %v1045 = vpack.c.b16 %v871, %v868
    %v1046 = vpack.c.b16 %v875, %v872
    %v1047 = vpack.c.b16 %v876, %v873
    %v1048 = vpack.c.b16 %v877, %v874
    %v1049 = vpack.c.b16 %v881, %v878
    %v1050 = vpack.c.b16 %v882, %v879
    %v1051 = vpack.c.b16 %v883, %v880
    %v1052 = vpack.c.b16 %v887, %v884
    %v1053 = vpack.c.b16 %v888, %v885
    %v1054 = vpack.c.b16 %v889, %v886
    %v1055 = vpack.c.b16 %v893, %v890
    %v1056 = vpack.c.b16 %v894, %v891
    %v1057 = vpack.c.b16 %v895, %v892
    %v1058 = vpack.c.b16 %v899, %v896
    %v1059 = vpack.c.b16 %v900, %v897
    %v1060 = vpack.c.b16 %v901, %v898
    %v1061 = vpack.c.b16 %v905, %v902
    %v1062 = vpack.c.b16 %v906, %v903
    %v1063 = vpack.c.b16 %v907, %v904
    %v1064 = vpack.c.b16 %v911, %v908
    %v1065 = vpack.c.b16 %v912, %v909
    %v1066 = vpack.c.b16 %v913, %v910
    %v1067 = vpack.c.b16 %v917, %v914
    %v1068 = vpack.c.b16 %v918, %v915
    %v1069 = vpack.c.b16 %v919, %v916
    %v1070 = vpack.c.b16 %v923, %v920
    %v1071 = vpack.c.b16 %v924, %v921
    %v1072 = vpack.c.b16 %v925, %v922
    %vm1220 = vcmask 130048
    %v1222 = vsel %vm1220, %v222, 0
    %1224 = vmatprep.subr.bf16.mxu0 %v927
    %1225 = vmatpush1.bf16.msra.mxu0 %v926
    %1226 = vmatprep.subr.bf16.mxu0 %v930
    %1227 = vmatpush1.bf16.msra.mxu0 %v929
    %1228 = vmatprep.subr.bf16.mxu0 %v933
    %1229 = vmatpush1.bf16.msra.mxu0 %v932
    %1230 = vmatprep.subr.bf16.mxu0 %v936
    %1231 = vmatpush1.bf16.msra.mxu0 %v935
    %1232 = vmatprep.subr.bf16.mxu0 %v939
    %1233 = vmatpush1.bf16.msra.mxu0 %v938
    %1234 = vmatprep.subr.bf16.mxu0 %v942
    %1235 = vmatpush1.bf16.msra.mxu0 %v941
    %1236 = vmatprep.subr.bf16.mxu0 %v945
    %1237 = vmatpush1.bf16.msra.mxu0 %v944
    %1238 = vmatprep.subr.bf16.mxu0 %v948
    %1239 = vmatpush1.bf16.msra.mxu0 %v947
    %1240 = vmatprep.subr.bf16.mxu0 %v951
    %1241 = vmatpush1.bf16.msra.mxu0 %v950
    %1242 = vmatprep.subr.bf16.mxu0 %v954
    %1243 = vmatpush1.bf16.msra.mxu0 %v953
    %1244 = vmatprep.subr.bf16.mxu0 %v957
    %1245 = vmatpush1.bf16.msra.mxu0 %v956
    %1246 = vmatprep.subr.bf16.mxu0 %v960
    %1247 = vmatpush1.bf16.msra.mxu0 %v959
    %1248 = vmatprep.subr.bf16.mxu0 %v963
    %1249 = vmatpush1.bf16.msra.mxu0 %v962
    %1250 = vmatprep.subr.bf16.mxu0 %v966
    %1251 = vmatpush1.bf16.msra.mxu0 %v965
    %1252 = vmatprep.subr.bf16.mxu0 %v969
    %1253 = vmatpush1.bf16.msra.mxu0 %v968
    %1254 = vmatprep.subr.bf16.mxu0 %v972
    %1255 = vmatpush1.bf16.msra.mxu0 %v971
    %1256 = vmatprep.mubr.bf16.mxu0 %v217
    %1257 = vmatmul.mubr.bf16.gmra.mrb[0].mxu0 %v216
    %v1258 = vpop.f32.mrb[0].mxu0
    %v1259 = vadd.f32 %v424, %v1258
    %v1260 = vpop.f32.mrb[0].mxu0
    %v1261 = vadd.f32 %v428, %v1260
    %v1262 = vpop.f32.mrb[0].mxu0
    %v1263 = vadd.f32 %v424, %v1262
    %v1264 = vpop.f32.mrb[0].mxu0
    %v1265 = vadd.f32 %v428, %v1264
    %1266 = vdwg.mxu0
    %1267 = vmatprep.subr.bf16.mxu0 %v975
    %1268 = vmatpush1.bf16.msra.mxu0 %v974
    %1269 = vmatprep.subr.bf16.mxu0 %v978
    %1270 = vmatpush1.bf16.msra.mxu0 %v977
    %1271 = vmatprep.subr.bf16.mxu0 %v981
    %1272 = vmatpush1.bf16.msra.mxu0 %v980
    %1273 = vmatprep.subr.bf16.mxu0 %v984
    %1274 = vmatpush1.bf16.msra.mxu0 %v983
    %1275 = vmatprep.subr.bf16.mxu0 %v987
    %1276 = vmatpush1.bf16.msra.mxu0 %v986
    %1277 = vmatprep.subr.bf16.mxu0 %v990
    %1278 = vmatpush1.bf16.msra.mxu0 %v989
    %1279 = vmatprep.subr.bf16.mxu0 %v993
    %1280 = vmatpush1.bf16.msra.mxu0 %v992
    %1281 = vmatprep.subr.bf16.mxu0 %v996
    %1282 = vmatpush1.bf16.msra.mxu0 %v995
    %1283 = vmatprep.subr.bf16.mxu0 %v999
    %1284 = vmatpush1.bf16.msra.mxu0 %v998
    %1285 = vmatprep.subr.bf16.mxu0 %v1002
    %1286 = vmatpush1.bf16.msra.mxu0 %v1001
    %1287 = vmatprep.subr.bf16.mxu0 %v1005
    %1288 = vmatpush1.bf16.msra.mxu0 %v1004
    %1289 = vmatprep.subr.bf16.mxu0 %v1008
    %1290 = vmatpush1.bf16.msra.mxu0 %v1007
    %1291 = vmatprep.subr.bf16.mxu0 %v1011
    %1292 = vmatpush1.bf16.msra.mxu0 %v1010
    %1293 = vmatprep.subr.bf16.mxu0 %v1014
    %1294 = vmatpush1.bf16.msra.mxu0 %v1013
    %1295 = vmatprep.subr.bf16.mxu0 %v1017
    %1296 = vmatpush1.bf16.msra.mxu0 %v1016
    %1297 = vmatprep.subr.bf16.mxu0 %v1020
    %1298 = vmatpush1.bf16.msra.mxu0 %v1019
    %1299 = vmatprep.mubr.bf16.mxu0 %v219
    %1300 = vmatmul.mubr.bf16.gmra.mrb[0].mxu0 %v218
    %v1301 = vpop.f32.mrb[0].mxu0
    %v1302 = vadd.f32 %v1259, %v1301
    %v1303 = vpop.f32.mrb[0].mxu0
    %v1304 = vadd.f32 %v1261, %v1303
    %v1305 = vpop.f32.mrb[0].mxu0
    %v1306 = vadd.f32 %v1263, %v1305
    %v1307 = vpop.f32.mrb[0].mxu0
    %v1308 = vadd.f32 %v1265, %v1307
    %1309 = vdwg.mxu0
    %1310 = vmatprep.subr.bf16.mxu0 %v1023
    %1311 = vmatpush1.bf16.msra.mxu0 %v1022
    %1312 = vmatprep.subr.bf16.mxu0 %v1026
    %1313 = vmatpush1.bf16.msra.mxu0 %v1025
    %1314 = vmatprep.subr.bf16.mxu0 %v1029
    %1315 = vmatpush1.bf16.msra.mxu0 %v1028
    %1316 = vmatprep.subr.bf16.mxu0 %v1032
    %1317 = vmatpush1.bf16.msra.mxu0 %v1031
    %1318 = vmatprep.subr.bf16.mxu0 %v1035
    %1319 = vmatpush1.bf16.msra.mxu0 %v1034
    %1320 = vmatprep.subr.bf16.mxu0 %v1038
    %1321 = vmatpush1.bf16.msra.mxu0 %v1037
    %1322 = vmatprep.subr.bf16.mxu0 %v1041
    %1323 = vmatpush1.bf16.msra.mxu0 %v1040
    %1324 = vmatprep.subr.bf16.mxu0 %v1044
    %1325 = vmatpush1.bf16.msra.mxu0 %v1043
    %1326 = vmatprep.subr.bf16.mxu0 %v1047
    %1327 = vmatpush1.bf16.msra.mxu0 %v1046
    %1328 = vmatprep.subr.bf16.mxu0 %v1050
    %1329 = vmatpush1.bf16.msra.mxu0 %v1049
    %1330 = vmatprep.subr.bf16.mxu0 %v1053
    %1331 = vmatpush1.bf16.msra.mxu0 %v1052
    %1332 = vmatprep.subr.bf16.mxu0 %v1056
    %1333 = vmatpush1.bf16.msra.mxu0 %v1055
    %1334 = vmatprep.subr.bf16.mxu0 %v1059
    %1335 = vmatpush1.bf16.msra.mxu0 %v1058
    %1336 = vmatprep.subr.bf16.mxu0 %v1062
    %1337 = vmatpush1.bf16.msra.mxu0 %v1061
    %1338 = vmatprep.subr.bf16.mxu0 %v1065
    %1339 = vmatpush1.bf16.msra.mxu0 %v1064
    %1340 = vmatprep.subr.bf16.mxu0 %v1068
    %1341 = vmatpush1.bf16.msra.mxu0 %v1067
    %1342 = vmatprep.mubr.bf16.mxu0 %v221
    %1343 = vmatmul.mubr.bf16.gmra.mrb[0].mxu0 %v220
    %v1344 = vpop.f32.mrb[0].mxu0
    %v1345 = vadd.f32 %v1302, %v1344
    %v1346 = vpop.f32.mrb[0].mxu0
    %v1347 = vadd.f32 %v1304, %v1346
    %v1348 = vpop.f32.mrb[0].mxu0
    %v1349 = vadd.f32 %v1306, %v1348
    %v1350 = vpop.f32.mrb[0].mxu0
    %v1351 = vadd.f32 %v1308, %v1350
    %1352 = vdwg.mxu0
    %1353 = vmatprep.subr.bf16.mxu0 %v1071
    %1354 = vmatpush1.bf16.msra.mxu0 %v1070
    %1355 = vmatprep.subr.bf16.mxu0 0
    %1356 = vmatpush1.bf16.msra.mxu0 0
    %1357 = vmatprep.subr.bf16.mxu0 0
    %1358 = vmatpush1.bf16.msra.mxu0 0
    %1359 = vmatprep.subr.bf16.mxu0 0
    %1360 = vmatpush1.bf16.msra.mxu0 0
    %1361 = vmatprep.subr.bf16.mxu0 0
    %1362 = vmatpush1.bf16.msra.mxu0 0
    %1363 = vmatprep.subr.bf16.mxu0 0
    %1364 = vmatpush1.bf16.msra.mxu0 0
    %1365 = vmatprep.subr.bf16.mxu0 0
    %1366 = vmatpush1.bf16.msra.mxu0 0
    %1367 = vmatprep.subr.bf16.mxu0 0
    %1368 = vmatpush1.bf16.msra.mxu0 0
    %1369 = vmatprep.subr.bf16.mxu0 0
    %1370 = vmatpush1.bf16.msra.mxu0 0
    %1371 = vmatprep.subr.bf16.mxu0 0
    %1372 = vmatpush1.bf16.msra.mxu0 0
    %1373 = vmatprep.subr.bf16.mxu0 0
    %1374 = vmatpush1.bf16.msra.mxu0 0
    %1375 = vmatprep.subr.bf16.mxu0 0
    %1376 = vmatpush1.bf16.msra.mxu0 0
    %1377 = vmatprep.subr.bf16.mxu0 0
    %1378 = vmatpush1.bf16.msra.mxu0 0
    %1379 = vmatprep.subr.bf16.mxu0 0
    %1380 = vmatpush1.bf16.msra.mxu0 0
    %1381 = vmatprep.subr.bf16.mxu0 0
    %1382 = vmatpush1.bf16.msra.mxu0 0
    %1383 = vmatprep.subr.bf16.mxu0 0
    %1384 = vmatpush1.bf16.msra.mxu0 0
    %1385 = vmatprep.mubr.bf16.mxu0 0
    %1386 = vmatmul.mubr.bf16.gmra.mrb[0].mxu0 %v1222
    %v1387 = vpop.f32.mrb[0].mxu0
    %v1388 = vadd.f32 %v1345, %v1387
    %v1389 = vpop.f32.mrb[0].mxu0
    %v1390 = vadd.f32 %v1347, %v1389
    %v1391 = vpop.f32.mrb[0].mxu0
    %v1392 = vadd.f32 %v1349, %v1391
    %v1393 = vpop.f32.mrb[0].mxu0
    %v1394 = vadd.f32 %v1351, %v1393
    %1395 = vdwg.mxu0
    %1396 = vmatprep.subr.bf16.mxu0 0
    %1397 = vmatpush1.bf16.msra.mxu0 %v928
    %1398 = vmatprep.subr.bf16.mxu0 0
    %1399 = vmatpush1.bf16.msra.mxu0 %v931
    %1400 = vmatprep.subr.bf16.mxu0 0
    %1401 = vmatpush1.bf16.msra.mxu0 %v934
    %1402 = vmatprep.subr.bf16.mxu0 0
    %1403 = vmatpush1.bf16.msra.mxu0 %v937
    %1404 = vmatprep.subr.bf16.mxu0 0
    %1405 = vmatpush1.bf16.msra.mxu0 %v940
    %1406 = vmatprep.subr.bf16.mxu0 0
    %1407 = vmatpush1.bf16.msra.mxu0 %v943
    %1408 = vmatprep.subr.bf16.mxu0 0
    %1409 = vmatpush1.bf16.msra.mxu0 %v946
    %1410 = vmatprep.subr.bf16.mxu0 0
    %1411 = vmatpush1.bf16.msra.mxu0 %v949
    %1412 = vmatprep.subr.bf16.mxu0 0
    %1413 = vmatpush1.bf16.msra.mxu0 %v952
    %1414 = vmatprep.subr.bf16.mxu0 0
    %1415 = vmatpush1.bf16.msra.mxu0 %v955
    %1416 = vmatprep.subr.bf16.mxu0 0
    %1417 = vmatpush1.bf16.msra.mxu0 %v958
    %1418 = vmatprep.subr.bf16.mxu0 0
    %1419 = vmatpush1.bf16.msra.mxu0 %v961
    %1420 = vmatprep.subr.bf16.mxu0 0
    %1421 = vmatpush1.bf16.msra.mxu0 %v964
    %1422 = vmatprep.subr.bf16.mxu0 0
    %1423 = vmatpush1.bf16.msra.mxu0 %v967
    %1424 = vmatprep.subr.bf16.mxu0 0
    %1425 = vmatpush1.bf16.msra.mxu0 %v970
    %1426 = vmatprep.subr.bf16.mxu0 0
    %1427 = vmatpush1.bf16.msra.mxu0 %v973
    %1428 = vmatprep.mubr.bf16.mxu0 %v217
    %1429 = vmatmul.mubr.bf16.gmra.mrb[0].mxu0 %v216
    %v1430 = vpop.f32.mrb[0].mxu0
    %v1431 = vadd.f32 %v432, %v1430
    %v1432 = vpop.f32.mrb[0].mxu0
    %v1433 = vpop.f32.mrb[0].mxu0
    %v1434 = vadd.f32 %v432, %v1433
    %v1435 = vpop.f32.mrb[0].mxu0
    %1436 = vdwg.mxu0
    %1437 = vmatprep.subr.bf16.mxu0 0
    %1438 = vmatpush1.bf16.msra.mxu0 %v976
    %1439 = vmatprep.subr.bf16.mxu0 0
    %1440 = vmatpush1.bf16.msra.mxu0 %v979
    %1441 = vmatprep.subr.bf16.mxu0 0
    %1442 = vmatpush1.bf16.msra.mxu0 %v982
    %1443 = vmatprep.subr.bf16.mxu0 0
    %1444 = vmatpush1.bf16.msra.mxu0 %v985
    %1445 = vmatprep.subr.bf16.mxu0 0
    %1446 = vmatpush1.bf16.msra.mxu0 %v988
    %1447 = vmatprep.subr.bf16.mxu0 0
    %1448 = vmatpush1.bf16.msra.mxu0 %v991
    %1449 = vmatprep.subr.bf16.mxu0 0
    %1450 = vmatpush1.bf16.msra.mxu0 %v994
    %1451 = vmatprep.subr.bf16.mxu0 0
    %1452 = vmatpush1.bf16.msra.mxu0 %v997
    %1453 = vmatprep.subr.bf16.mxu0 0
    %1454 = vmatpush1.bf16.msra.mxu0 %v1000
    %1455 = vmatprep.subr.bf16.mxu0 0
    %1456 = vmatpush1.bf16.msra.mxu0 %v1003
    %1457 = vmatprep.subr.bf16.mxu0 0
    %1458 = vmatpush1.bf16.msra.mxu0 %v1006
    %1459 = vmatprep.subr.bf16.mxu0 0
    %1460 = vmatpush1.bf16.msra.mxu0 %v1009
    %1461 = vmatprep.subr.bf16.mxu0 0
    %1462 = vmatpush1.bf16.msra.mxu0 %v1012
    %1463 = vmatprep.subr.bf16.mxu0 0
    %1464 = vmatpush1.bf16.msra.mxu0 %v1015
    %1465 = vmatprep.subr.bf16.mxu0 0
    %1466 = vmatpush1.bf16.msra.mxu0 %v1018
    %1467 = vmatprep.subr.bf16.mxu0 0
    %1468 = vmatpush1.bf16.msra.mxu0 %v1021
    %1469 = vmatprep.mubr.bf16.mxu0 %v219
    %1470 = vmatmul.mubr.bf16.gmra.mrb[0].mxu0 %v218
    %v1471 = vpop.f32.mrb[0].mxu0
    %v1472 = vadd.f32 %v1431, %v1471
    %v1473 = vpop.f32.mrb[0].mxu0
    %v1474 = vpop.f32.mrb[0].mxu0
    %v1475 = vadd.f32 %v1434, %v1474
    %v1476 = vpop.f32.mrb[0].mxu0
    %1477 = vdwg.mxu0
    %1478 = vmatprep.subr.bf16.mxu0 0
    %1479 = vmatpush1.bf16.msra.mxu0 %v1024
    %1480 = vmatprep.subr.bf16.mxu0 0
    %1481 = vmatpush1.bf16.msra.mxu0 %v1027
    %1482 = vmatprep.subr.bf16.mxu0 0
    %1483 = vmatpush1.bf16.msra.mxu0 %v1030
    %1484 = vmatprep.subr.bf16.mxu0 0
    %1485 = vmatpush1.bf16.msra.mxu0 %v1033
    %1486 = vmatprep.subr.bf16.mxu0 0
    %1487 = vmatpush1.bf16.msra.mxu0 %v1036
    %1488 = vmatprep.subr.bf16.mxu0 0
    %1489 = vmatpush1.bf16.msra.mxu0 %v1039
    %1490 = vmatprep.subr.bf16.mxu0 0
    %1491 = vmatpush1.bf16.msra.mxu0 %v1042
    %1492 = vmatprep.subr.bf16.mxu0 0
    %1493 = vmatpush1.bf16.msra.mxu0 %v1045
    %1494 = vmatprep.subr.bf16.mxu0 0
    %1495 = vmatpush1.bf16.msra.mxu0 %v1048
    %1496 = vmatprep.subr.bf16.mxu0 0
    %1497 = vmatpush1.bf16.msra.mxu0 %v1051
    %1498 = vmatprep.subr.bf16.mxu0 0
    %1499 = vmatpush1.bf16.msra.mxu0 %v1054
    %1500 = vmatprep.subr.bf16.mxu0 0
    %1501 = vmatpush1.bf16.msra.mxu0 %v1057
    %1502 = vmatprep.subr.bf16.mxu0 0
    %1503 = vmatpush1.bf16.msra.mxu0 %v1060
    %1504 = vmatprep.subr.bf16.mxu0 0
    %1505 = vmatpush1.bf16.msra.mxu0 %v1063
    %1506 = vmatprep.subr.bf16.mxu0 0
    %1507 = vmatpush1.bf16.msra.mxu0 %v1066
    %1508 = vmatprep.subr.bf16.mxu0 0
    %1509 = vmatpush1.bf16.msra.mxu0 %v1069
    %1510 = vmatprep.mubr.bf16.mxu0 %v221
    %1511 = vmatmul.mubr.bf16.gmra.mrb[0].mxu0 %v220
    %v1512 = vpop.f32.mrb[0].mxu0
    %v1513 = vadd.f32 %v1472, %v1512
    %v1514 = vpop.f32.mrb[0].mxu0
    %v1515 = vpop.f32.mrb[0].mxu0
    %v1516 = vadd.f32 %v1475, %v1515
    %v1517 = vpop.f32.mrb[0].mxu0
    %1518 = vdwg.mxu0
    %1519 = vmatprep.subr.bf16.mxu0 0
    %1520 = vmatpush1.bf16.msra.mxu0 %v1072
    %1521 = vmatprep.subr.bf16.mxu0 0
    %1522 = vmatpush1.bf16.msra.mxu0 0
    %1523 = vmatprep.subr.bf16.mxu0 0
    %1524 = vmatpush1.bf16.msra.mxu0 0
    %1525 = vmatprep.subr.bf16.mxu0 0
    %1526 = vmatpush1.bf16.msra.mxu0 0
    %1527 = vmatprep.subr.bf16.mxu0 0
    %1528 = vmatpush1.bf16.msra.mxu0 0
    %1529 = vmatprep.subr.bf16.mxu0 0
    %1530 = vmatpush1.bf16.msra.mxu0 0
    %1531 = vmatprep.subr.bf16.mxu0 0
    %1532 = vmatpush1.bf16.msra.mxu0 0
    %1533 = vmatprep.subr.bf16.mxu0 0
    %1534 = vmatpush1.bf16.msra.mxu0 0
    %1535 = vmatprep.subr.bf16.mxu0 0
    %1536 = vmatpush1.bf16.msra.mxu0 0
    %1537 = vmatprep.subr.bf16.mxu0 0
    %1538 = vmatpush1.bf16.msra.mxu0 0
    %1539 = vmatprep.subr.bf16.mxu0 0
    %1540 = vmatpush1.bf16.msra.mxu0 0
    %1541 = vmatprep.subr.bf16.mxu0 0
    %1542 = vmatpush1.bf16.msra.mxu0 0
    %1543 = vmatprep.subr.bf16.mxu0 0
    %1544 = vmatpush1.bf16.msra.mxu0 0
    %1545 = vmatprep.subr.bf16.mxu0 0
    %1546 = vmatpush1.bf16.msra.mxu0 0
    %1547 = vmatprep.subr.bf16.mxu0 0
    %1548 = vmatpush1.bf16.msra.mxu0 0
    %1549 = vmatprep.subr.bf16.mxu0 0
    %1550 = vmatpush1.bf16.msra.mxu0 0
    %1551 = vmatprep.mubr.bf16.mxu0 0
    %1552 = vmatmul.mubr.bf16.gmra.mrb[0].mxu0 %v1222
    %v1553 = vpop.f32.mrb[0].mxu0
    %v1554 = vadd.f32 %v1513, %v1553
    %v1555 = vpop.f32.mrb[0].mxu0
    %v1556 = vpop.f32.mrb[0].mxu0
    %v1557 = vadd.f32 %v1516, %v1556
    %v1558 = vpop.f32.mrb[0].mxu0
    %1559 = vdwg.mxu0
    %v1560 = vmax.f32 %v1388, 0.0
    %v1561 = vmax.f32 %v1390, 0.0
    %v1562 = vmax.f32 %v1554, 0.0
    %v1563 = vmax.f32 %v1392, 0.0
    %v1564 = vmax.f32 %v1394, 0.0
    %v1565 = vmax.f32 %v1557, 0.0
    %v1566 = vpack.c.bf16 %v1563, %v1560
    %v1567 = vpack.c.bf16 %v1564, %v1561
    %v1568 = vpack.c.bf16 %v1565, %v1562
    %v1569 = vld [vmem:[%s3] sm:$0xf]
    %v1570 = vld [vmem:[%s3 + $0x4] sm:$0xf]
    %v1571 = vld [vmem:[%s3 + $0x8] sm:$0xf]
    %v1572 = vld [vmem:[%s3 + $0xc] sm:$0xf]
    %v1573 = vld [vmem:[%s3 + $0x10] sm:$0xf]
    %v1574 = vld [vmem:[%s3 + $0x14] sm:$0xf]
    %v1575 = vld [vmem:[%s3 + $0x18] sm:$0xf]
    %v1576 = vld [vmem:[%s3 + $0x1c] sm:$0xf]
    %v1577 = vld [vmem:[%s3 + $0x20] sm:$0xf]
    %v1578 = vld [vmem:[%s3 + $0x24] sm:$0xf]
    %v1579 = vld [vmem:[%s3 + $0x28] sm:$0xf]
    %v1580 = vld [vmem:[%s3 + $0x2c] sm:$0xf]
    %v1581 = vld [vmem:[%s3 + $0x30] sm:$0xf]
    %v1582 = vld [vmem:[%s3 + $0x34] sm:$0xf]
    %v1583 = vld [vmem:[%s3 + $0x38] sm:$0xf]
    %v1584 = vld [vmem:[%s3 + $0x3c] sm:$0xf]
    %v1585 = vld [vmem:[%s3 + $0x40] sm:$0xf]
    %v1586 = vld [vmem:[%s3 + $0x44] sm:$0xf]
    %v1587 = vld [vmem:[%s3 + $0x48] sm:$0xf]
    %v1588 = vld [vmem:[%s3 + $0x4c] sm:$0xf]
    %v1589 = vld [vmem:[%s3 + $0x50] sm:$0xf]
    %v1590 = vld [vmem:[%s3 + $0x54] sm:$0xf]
    %v1591 = vld [vmem:[%s3 + $0x58] sm:$0xf]
    %v1592 = vld [vmem:[%s3 + $0x5c] sm:$0xf]
    %v1593 = vld [vmem:[%s3 + $0x60] sm:$0xf]
    %v1594 = vld [vmem:[%s3 + $0x64] sm:$0xf]
    %v1595 = vld [vmem:[%s3 + $0x68] sm:$0xf]
    %v1596 = vld [vmem:[%s3 + $0x6c] sm:$0xf]
    %v1597 = vld [vmem:[%s3 + $0x70] sm:$0xf]
    %v1598 = vld [vmem:[%s3 + $0x74] sm:$0xf]
    %v1599 = vld [vmem:[%s3 + $0x78] sm:$0xf]
    %v1600 = vld [vmem:[%s3 + $0x7c] sm:$0xf]
    %v1601 = vld [vmem:[%s3 + $0x80] sm:$0xf]
    %v1602 = vld [vmem:[%s3 + $0x84] sm:$0xf]
    %v1603 = vld [vmem:[%s3 + $0x88] sm:$0xf]
    %v1604 = vld [vmem:[%s3 + $0x8c] sm:$0xf]
    %v1605 = vld [vmem:[%s3 + $0x90] sm:$0xf]
    %v1606 = vld [vmem:[%s3 + $0x94] sm:$0x3]
    %v1607 = vld [vmem:[%s4] sm:$0x1]
    %v1609 = vlaneseq
    %v1610 = vshrl.u32 %v1609, 7
    %v1611 = vsub.s32 0, %v1610
    %v1612 = vrot.slane %v1607, %v1611
    %v1652 = vunpack.c.l.b16 %v1569
    %v1653 = vunpack.c.l.b16 %v1570
    %v1654 = vunpack.c.l.b16 %v1571
    %v1655 = vunpack.c.l.b16 %v1572
    %v1656 = vunpack.c.l.b16 %v1573
    %v1657 = vunpack.c.l.b16 %v1574
    %v1658 = vunpack.c.l.b16 %v1575
    %v1659 = vunpack.c.l.b16 %v1576
    %v1660 = vunpack.c.l.b16 %v1577
    %v1661 = vunpack.c.l.b16 %v1578
    %v1662 = vunpack.c.l.b16 %v1579
    %v1663 = vunpack.c.l.b16 %v1580
    %v1664 = vunpack.c.l.b16 %v1581
    %v1665 = vunpack.c.l.b16 %v1582
    %v1666 = vunpack.c.l.b16 %v1583
    %v1667 = vunpack.c.l.b16 %v1584
    %v1668 = vunpack.c.l.b16 %v1585
    %v1669 = vunpack.c.l.b16 %v1586
    %v1670 = vunpack.c.l.b16 %v1587
    %v1671 = vunpack.c.l.b16 %v1588
    %v1672 = vunpack.c.l.b16 %v1589
    %v1673 = vunpack.c.l.b16 %v1590
    %v1674 = vunpack.c.l.b16 %v1591
    %v1675 = vunpack.c.l.b16 %v1592
    %v1676 = vunpack.c.l.b16 %v1593
    %v1677 = vunpack.c.l.b16 %v1594
    %v1678 = vunpack.c.l.b16 %v1595
    %v1679 = vunpack.c.l.b16 %v1596
    %v1680 = vunpack.c.l.b16 %v1597
    %v1681 = vunpack.c.l.b16 %v1598
    %v1682 = vunpack.c.l.b16 %v1599
    %v1683 = vunpack.c.l.b16 %v1600
    %v1684 = vunpack.c.l.b16 %v1601
    %v1685 = vunpack.c.l.b16 %v1602
    %v1686 = vunpack.c.l.b16 %v1603
    %v1687 = vunpack.c.l.b16 %v1604
    %v1688 = vunpack.c.l.b16 %v1605
    %v1689 = vunpack.c.l.b16 %v1606
    %v1690 = vpack.c.b16 %v1653, %v1652
    %v1691 = vpack.c.b16 %v1655, %v1654
    %v1692 = vpack.c.b16 %v1657, %v1656
    %v1693 = vpack.c.b16 %v1659, %v1658
    %v1694 = vpack.c.b16 %v1661, %v1660
    %v1695 = vpack.c.b16 %v1663, %v1662
    %v1696 = vpack.c.b16 %v1665, %v1664
    %v1697 = vpack.c.b16 %v1667, %v1666
    %v1698 = vpack.c.b16 %v1669, %v1668
    %v1699 = vpack.c.b16 %v1671, %v1670
    %v1700 = vpack.c.b16 %v1673, %v1672
    %v1701 = vpack.c.b16 %v1675, %v1674
    %v1702 = vpack.c.b16 %v1677, %v1676
    %v1703 = vpack.c.b16 %v1679, %v1678
    %v1704 = vpack.c.b16 %v1681, %v1680
    %v1705 = vpack.c.b16 %v1683, %v1682
    %v1706 = vpack.c.b16 %v1685, %v1684
    %v1707 = vpack.c.b16 %v1687, %v1686
    %v1708 = vpack.c.b16 %v1689, %v1688
    %vm1727 = vcmask 359424
    %v1729 = vsel %vm1727, %v1568, 0
    %vm1731 = vcmask 1045504
    %v1733 = vsel %vm1731, %v1708, 0
    %1735 = vmatprep.subr.bf16.mxu0 0
    %1736 = vmatpush1.bf16.msra.mxu0 %v1690
    %1737 = vmatprep.subr.bf16.mxu0 0
    %1738 = vmatpush1.bf16.msra.mxu0 %v1691
    %1739 = vmatprep.subr.bf16.mxu0 0
    %1740 = vmatpush1.bf16.msra.mxu0 %v1692
    %1741 = vmatprep.subr.bf16.mxu0 0
    %1742 = vmatpush1.bf16.msra.mxu0 %v1693
    %1743 = vmatprep.subr.bf16.mxu0 0
    %1744 = vmatpush1.bf16.msra.mxu0 %v1694
    %1745 = vmatprep.subr.bf16.mxu0 0
    %1746 = vmatpush1.bf16.msra.mxu0 %v1695
    %1747 = vmatprep.subr.bf16.mxu0 0
    %1748 = vmatpush1.bf16.msra.mxu0 %v1696
    %1749 = vmatprep.subr.bf16.mxu0 0
    %1750 = vmatpush1.bf16.msra.mxu0 %v1697
    %1751 = vmatprep.subr.bf16.mxu0 0
    %1752 = vmatpush1.bf16.msra.mxu0 %v1698
    %1753 = vmatprep.subr.bf16.mxu0 0
    %1754 = vmatpush1.bf16.msra.mxu0 %v1699
    %1755 = vmatprep.subr.bf16.mxu0 0
    %1756 = vmatpush1.bf16.msra.mxu0 %v1700
    %1757 = vmatprep.subr.bf16.mxu0 0
    %1758 = vmatpush1.bf16.msra.mxu0 %v1701
    %1759 = vmatprep.subr.bf16.mxu0 0
    %1760 = vmatpush1.bf16.msra.mxu0 %v1702
    %1761 = vmatprep.subr.bf16.mxu0 0
    %1762 = vmatpush1.bf16.msra.mxu0 %v1703
    %1763 = vmatprep.subr.bf16.mxu0 0
    %1764 = vmatpush1.bf16.msra.mxu0 %v1704
    %1765 = vmatprep.subr.bf16.mxu0 0
    %1766 = vmatpush1.bf16.msra.mxu0 %v1705
    %1767 = vmatprep.mubr.bf16.mxu0 %v1567
    %1768 = vmatmul.mubr.bf16.gmra.mrb[0].mxu0 %v1566
    %v1769 = vpop.f32.mrb[0].mxu0
    %v1770 = vadd.f32 %v1612, %v1769
    %v1771 = vpop.f32.mrb[0].mxu0
    %v1772 = vpop.f32.mrb[0].mxu0
    %v1773 = vadd.f32 %v1612, %v1772
    %v1774 = vpop.f32.mrb[0].mxu0
    %1775 = vdwg.mxu0
    %1776 = vmatprep.subr.bf16.mxu0 0
    %1777 = vmatpush1.bf16.msra.mxu0 %v1706
    %1778 = vmatprep.subr.bf16.mxu0 0
    %1779 = vmatpush1.bf16.msra.mxu0 %v1707
    %1780 = vmatprep.subr.bf16.mxu0 0
    %1781 = vmatpush1.bf16.msra.mxu0 %v1733
    %1782 = vmatprep.subr.bf16.mxu0 0
    %1783 = vmatpush1.bf16.msra.mxu0 0
    %1784 = vmatprep.subr.bf16.mxu0 0
    %1785 = vmatpush1.bf16.msra.mxu0 0
    %1786 = vmatprep.subr.bf16.mxu0 0
    %1787 = vmatpush1.bf16.msra.mxu0 0
    %1788 = vmatprep.subr.bf16.mxu0 0
    %1789 = vmatpush1.bf16.msra.mxu0 0
    %1790 = vmatprep.subr.bf16.mxu0 0
    %1791 = vmatpush1.bf16.msra.mxu0 0
    %1792 = vmatprep.subr.bf16.mxu0 0
    %1793 = vmatpush1.bf16.msra.mxu0 0
    %1794 = vmatprep.subr.bf16.mxu0 0
    %1795 = vmatpush1.bf16.msra.mxu0 0
    %1796 = vmatprep.subr.bf16.mxu0 0
    %1797 = vmatpush1.bf16.msra.mxu0 0
    %1798 = vmatprep.subr.bf16.mxu0 0
    %1799 = vmatpush1.bf16.msra.mxu0 0
    %1800 = vmatprep.subr.bf16.mxu0 0
    %1801 = vmatpush1.bf16.msra.mxu0 0
    %1802 = vmatprep.subr.bf16.mxu0 0
    %1803 = vmatpush1.bf16.msra.mxu0 0
    %1804 = vmatprep.subr.bf16.mxu0 0
    %1805 = vmatpush1.bf16.msra.mxu0 0
    %1806 = vmatprep.subr.bf16.mxu0 0
    %1807 = vmatpush1.bf16.msra.mxu0 0
    %1808 = vmatprep.mubr.bf16.mxu0 0
    %1809 = vmatmul.mubr.bf16.gmra.mrb[0].mxu0 %v1729
    %v1810 = vpop.f32.mrb[0].mxu0
    %v1811 = vadd.f32 %v1770, %v1810
    %v1812 = vpop.f32.mrb[0].mxu0
    %v1813 = vpop.f32.mrb[0].mxu0
    %v1814 = vadd.f32 %v1773, %v1813
    %v1815 = vpop.f32.mrb[0].mxu0
    %1816 = vdwg.mxu0
    %v1817 = vmax.f32 %v1811, 0.0
    %v1818 = vmax.f32 %v1814, 0.0
    %v1819 = vpack.c.bf16 %v1818, %v1817
    %v1820 = vld [vmem:[%s5] sm:$0xf]
    %v1821 = vld [vmem:[%s5 + $0x4] sm:$0xf]
    %v1822 = vld [vmem:[%s5 + $0x8] sm:$0xf]
    %v1823 = vld [vmem:[%s5 + $0xc] sm:$0xf]
    %v1824 = vld [vmem:[%s5 + $0x10] sm:$0xf]
    %v1825 = vld [vmem:[%s5 + $0x14] sm:$0xf]
    %v1826 = vld [vmem:[%s5 + $0x18] sm:$0xf]
    %v1827 = vld [vmem:[%s5 + $0x1c] sm:$0xf]
    %v1828 = vld [vmem:[%s5 + $0x20] sm:$0xf]
    %v1829 = vld [vmem:[%s5 + $0x24] sm:$0xf]
    %v1830 = vld [vmem:[%s5 + $0x28] sm:$0xf]
    %v1831 = vld [vmem:[%s5 + $0x2c] sm:$0xf]
    %v1832 = vld [vmem:[%s5 + $0x30] sm:$0xf]
    %v1833 = vld [vmem:[%s5 + $0x34] sm:$0xf]
    %v1834 = vld [vmem:[%s5 + $0x38] sm:$0xf]
    %v1835 = vld [vmem:[%s5 + $0x3c] sm:$0xf]
    %v1836 = vld [vmem:[%s6] sm:$0x1]
    %v1838 = vlaneseq
    %v1839 = vshrl.u32 %v1838, 7
    %v1840 = vsub.s32 0, %v1839
    %v1841 = vrot.slane %v1836, %v1840
    %v1859 = vunpack.c.l.b16 %v1820
    %v1860 = vunpack.c.l.b16 %v1821
    %v1861 = vunpack.c.l.b16 %v1822
    %v1862 = vunpack.c.l.b16 %v1823
    %v1863 = vunpack.c.l.b16 %v1824
    %v1864 = vunpack.c.l.b16 %v1825
    %v1865 = vunpack.c.l.b16 %v1826
    %v1866 = vunpack.c.l.b16 %v1827
    %v1867 = vunpack.c.l.b16 %v1828
    %v1868 = vunpack.c.l.b16 %v1829
    %v1869 = vunpack.c.l.b16 %v1830
    %v1870 = vunpack.c.l.b16 %v1831
    %v1871 = vunpack.c.l.b16 %v1832
    %v1872 = vunpack.c.l.b16 %v1833
    %v1873 = vunpack.c.l.b16 %v1834
    %v1874 = vunpack.c.l.b16 %v1835
    %v1875 = vpack.c.b16 %v1860, %v1859
    %v1876 = vpack.c.b16 %v1862, %v1861
    %v1877 = vpack.c.b16 %v1864, %v1863
    %v1878 = vpack.c.b16 %v1866, %v1865
    %v1879 = vpack.c.b16 %v1868, %v1867
    %v1880 = vpack.c.b16 %v1870, %v1869
    %v1881 = vpack.c.b16 %v1872, %v1871
    %v1882 = vpack.c.b16 %v1874, %v1873
    %1891 = vmatprep.subr.bf16.mxu0 0
    %1892 = vmatpush1.bf16.msra.mxu0 %v1875
    %1893 = vmatprep.subr.bf16.mxu0 0
    %1894 = vmatpush1.bf16.msra.mxu0 %v1876
    %1895 = vmatprep.subr.bf16.mxu0 0
    %1896 = vmatpush1.bf16.msra.mxu0 %v1877
    %1897 = vmatprep.subr.bf16.mxu0 0
    %1898 = vmatpush1.bf16.msra.mxu0 %v1878
    %1899 = vmatprep.subr.bf16.mxu0 0
    %1900 = vmatpush1.bf16.msra.mxu0 %v1879
    %1901 = vmatprep.subr.bf16.mxu0 0
    %1902 = vmatpush1.bf16.msra.mxu0 %v1880
    %1903 = vmatprep.subr.bf16.mxu0 0
    %1904 = vmatpush1.bf16.msra.mxu0 %v1881
    %1905 = vmatprep.subr.bf16.mxu0 0
    %1906 = vmatpush1.bf16.msra.mxu0 %v1882
    %1907 = vmatprep.subr.bf16.mxu0 0
    %1908 = vmatpush1.bf16.msra.mxu0 0
    %1909 = vmatprep.subr.bf16.mxu0 0
    %1910 = vmatpush1.bf16.msra.mxu0 0
    %1911 = vmatprep.subr.bf16.mxu0 0
    %1912 = vmatpush1.bf16.msra.mxu0 0
    %1913 = vmatprep.subr.bf16.mxu0 0
    %1914 = vmatpush1.bf16.msra.mxu0 0
    %1915 = vmatprep.subr.bf16.mxu0 0
    %1916 = vmatpush1.bf16.msra.mxu0 0
    %1917 = vmatprep.subr.bf16.mxu0 0
    %1918 = vmatpush1.bf16.msra.mxu0 0
    %1919 = vmatprep.subr.bf16.mxu0 0
    %1920 = vmatpush1.bf16.msra.mxu0 0
    %1921 = vmatprep.subr.bf16.mxu0 0
    %1922 = vmatpush1.bf16.msra.mxu0 0
    %1923 = vmatprep.mubr.bf16.mxu0 0
    %1924 = vmatmul.mubr.bf16.gmra.mrb[0].mxu0 %v1819
    %v1925 = vpop.f32.mrb[0].mxu0
    %v1926 = vadd.f32 %v1841, %v1925
    %v1927 = vpop.f32.mrb[0].mxu0
    %v1928 = vpop.f32.mrb[0].mxu0
    %v1929 = vadd.f32 %v1841, %v1928
    %v1930 = vpop.f32.mrb[0].mxu0
    %1931 = vdwg.mxu0
    %v1932 = vpack.c.bf16 %v1929, %v1926
    %v1934 = vcombine.high %v1932, %v1932
    %v1936 = vunpack.c.l.s4 1966171168
    %v1937 = vunpack.c.0.s8 %v1936
    %v1938 = vlaneseq
    %v1939 = vshrl.u32 %v1938, 7
    %v1940 = vsub.s32 %v1937, %v1939
    %v1941 = vrot.slane %v1932, %v1940
    %v1943 = vunpack.c.l.s4 1966171168
    %v1944 = vunpack.c.0.s8 %v1943
    %v1945 = vlaneseq
    %v1946 = vshrl.u32 %v1945, 7
    %v1947 = vsub.s32 %v1944, %v1946
    %v1948 = vrot.slane %v1934, %v1947
    %v1949 = vcombine.high %v1941, %v1941
    %v1950 = vcombine.high %v1948, %v1948
    %v1952 = vunpack.c.l.s4 1966171168
    %v1953 = vunpack.c.0.s8 %v1952
    %v1954 = vlaneseq
    %v1955 = vshrl.u32 %v1954, 7
    %v1956 = vsub.s32 %v1953, %v1955
    %v1957 = vrot.slane %v1941, %v1956
    %v1959 = vunpack.c.l.s4 1966171168
    %v1960 = vunpack.c.0.s8 %v1959
    %v1961 = vlaneseq
    %v1962 = vshrl.u32 %v1961, 7
    %v1963 = vsub.s32 %v1960, %v1962
    %v1964 = vrot.slane %v1948, %v1963
    %v1966 = vunpack.c.l.s4 1966171168
    %v1967 = vunpack.c.0.s8 %v1966
    %v1968 = vlaneseq
    %v1969 = vshrl.u32 %v1968, 7
    %v1970 = vsub.s32 %v1967, %v1969
    %v1971 = vrot.slane %v1949, %v1970
    %v1973 = vunpack.c.l.s4 1966171168
    %v1974 = vunpack.c.0.s8 %v1973
    %v1975 = vlaneseq
    %v1976 = vshrl.u32 %v1975, 7
    %v1977 = vsub.s32 %v1974, %v1976
    %v1978 = vrot.slane %v1950, %v1977
    %v1979 = vcombine.high %v1957, %v1957
    %v1980 = vcombine.high %v1964, %v1964
    %v1981 = vcombine.high %v1971, %v1971
    %v1982 = vcombine.high %v1978, %v1978
    %1991 = vst [vmem:[#allocation2] sm:$0x1] %v1957
    %1992 = vst [vmem:[#allocation2 + $0x1] sm:$0x1] %v1971
    %1993 = vst [vmem:[#allocation2 + $0x2] sm:$0x1] %v1979
    %1994 = vst [vmem:[#allocation2 + $0x3] sm:$0x1] %v1981
    %1995 = vst [vmem:[#allocation2 + $0x4] sm:$0x1] %v1964
    %1996 = vst [vmem:[#allocation2 + $0x5] sm:$0x1] %v1978
    %1997 = vst [vmem:[#allocation2 + $0x6] sm:$0x1] %v1980
    %1998 = vst [vmem:[#allocation2 + $0x7] sm:$0x1] %v1982
    // Predicated region
    $region30: #{tpu_custom_call.1} parent=1 // pred_check
      _
    $region31: #{tpu_custom_call.1} parent=1 // pred_check_branch
      %2000 = sbr.rel (0) target = $region33
    $region32: #{tpu_custom_call.1} parent=1 // pred_region
      %s2002 = ssub.s32 128, 16
      %2003 = vsyncadd [#allocation3], %s2002
      %s2004 = sshll.u32 [#allocation2], 4
      %s2005 = int_to_ptr.vmem [resolvable:$true] %s2004
      %2010 = dma.vmem_to_hbm [thread:$0]  %s2005, 16, %s7, [#allocation3], 16, 16, 1
    $region33: #{tpu_custom_call.1} parent=1 // pred_fallthru
      _
    // Predicated region
    $region34: #{tpu_custom_call.1} parent=1 // pred_check
      _
    $region35: #{tpu_custom_call.1} parent=1 // pred_check_branch
      %2012 = sbr.rel (0) target = $region37
    $region36: #{tpu_custom_call.1} parent=1 // pred_region
      %2013 = dma.done [#allocation3], 128
    $region37: #{tpu_custom_call.1} parent=1 // pred_fallthru
      _
    %2014 = vsyncpa [#allocation3], 1

</llo_original>
